<compile_context>
chip_gen: v7x
topology: tpu7x:2x2x1
jax: 0.10.0
libtpu: 0.0.40
codegen_flags: <defaults>
</compile_context>

<pallas_src>
import jax
import jax.numpy as jnp
from jax.experimental import pallas as pl

# ----------------------------- model sizes ---------------------------------
B = 2            # batch
S = 8            # sequence length (== max_sequence_length)
V = 16           # trg_vocab_size
E = 32           # embedding_size
H = 4            # attention heads (assumed encoder config)
DH = E // H      # per-head dim
F = 64           # transformer FFN hidden dim (assumed encoder config)
E2 = E // 2
N = 2 * B * S    # fused rows: parent + child streams for the whole batch
PAD_IDX = 0
NEG = -1e9
EPS_LN = 1e-5
EPS_BN = 1e-5
SLOPE = 0.01     # nn.LeakyReLU default negative slope

# packed-vector row indices (rows of the (11, 3E) `vec` array)
R_BQKV, R_BO, R_LN1G, R_LN1B, R_BF1, R_BF2, R_LN2G, R_LN2B, R_BH1, R_BH2, R_BH3 = range(11)


def _layer_norm(x, g, b):
    mu = jnp.mean(x, axis=-1, keepdims=True)
    var = jnp.mean((x - mu) ** 2, axis=-1, keepdims=True)
    return (x - mu) * jax.lax.rsqrt(var + EPS_LN) * g + b


def _leaky_relu(x):
    return jnp.where(x >= 0, x, SLOPE * x)


def discriminator_kernel(
    x_in_ref,    # (N, V)   stacked one-hot(src) rows then trg rows
    bias_ref,    # (N, N)   additive attention bias (block-diag + key padding)
    pos_ref,     # (N, E)   position embeddings, pre-tiled per sequence
    w_emb_ref,   # (V, E)   shared embedding / linear weight
    w_qkv_ref,   # (E, 3E)  fused Q|K|V projection
    w_o_ref,     # (E, E)   attention output projection
    w_f1_ref,    # (E, F)   FFN up
    w_f2_ref,    # (F, E)   FFN down
    w_h1_ref,    # (2E, E)  BN1-folded first_linear
    w_h2_ref,    # (E, E2)  BN2-folded second_linear
    w_h3_ref,    # (1, E2)  BN3-folded third_linear (row vector)
    vec_ref,     # (11, 3E) packed bias / LayerNorm rows
    out_ref,     # (1, B*S) sigmoid output, lane-dense row
):
    f32 = jnp.float32
    vec = vec_ref[...]
    bias = bias_ref[...]

    # embedding(src) == one_hot(src) @ W_emb ; linear(trg) == trg @ W_emb.
    # Both streams / both batch elements share ONE matmul over the stacked rows.
    # Dropout: inference-mode identity.
    x = jnp.dot(x_in_ref[...], w_emb_ref[...], preferred_element_type=f32) + pos_ref[...]

    # ---------------- 1-layer post-norm transformer encoder ----------------
    qkv = jnp.dot(x, w_qkv_ref[...], preferred_element_type=f32) + vec[R_BQKV:R_BQKV + 1, :]
    q = qkv[:, 0:E]
    k = qkv[:, E:2 * E]
    v = qkv[:, 2 * E:3 * E]
    w_o = w_o_ref[...]
    scale = 1.0 / (DH ** 0.5)

    ctx = None
    for h in range(H):                                    # static head loop (H=4)
        qh = q[:, h * DH:(h + 1) * DH]
        kh = k[:, h * DH:(h + 1) * DH]
        vh = v[:, h * DH:(h + 1) * DH]
        # scores over ALL N rows; the bias matrix blocks cross-sequence attention
        # and masks padded keys in one shot (no per-sequence batching needed).
        s = jax.lax.dot_general(qh, kh, (((1,), (1,)), ((), ())),
                                preferred_element_type=f32) * scale + bias
        m = jnp.max(s, axis=-1, keepdims=True)
        e = jnp.exp(s - m)
        p = e * pl.reciprocal(jnp.sum(e, axis=-1, keepdims=True), approx=True)
        oh = jnp.dot(p, vh, preferred_element_type=f32)   # (N, DH)
        # accumulate straight into the output projection (no lane concat)
        term = jnp.dot(oh, w_o[h * DH:(h + 1) * DH, :], preferred_element_type=f32)
        ctx = term if ctx is None else ctx + term
    ctx = ctx + vec[R_BO:R_BO + 1, :E]

    x = _layer_norm(x + ctx, vec[R_LN1G:R_LN1G + 1, :E], vec[R_LN1B:R_LN1B + 1, :E])
    ff = jnp.dot(x, w_f1_ref[...], preferred_element_type=f32) + vec[R_BF1:R_BF1 + 1, :F]
    ff = jnp.maximum(ff, 0.0)                             # relu
    ff = jnp.dot(ff, w_f2_ref[...], preferred_element_type=f32) + vec[R_BF2:R_BF2 + 1, :E]
    x = _layer_norm(x + ff, vec[R_LN2G:R_LN2G + 1, :E], vec[R_LN2B:R_LN2B + 1, :E])

    # -------- head MLP (eval BatchNorms folded into the linears at init) --------
    BS = B * S
    enc_p = x[0:BS, :]                                    # parent encodings
    enc_c = x[BS:2 * BS, :]                               # child encodings (same (b,s) order)
    w_h1 = w_h1_ref[...]
    # concat([enc_p, enc_c], -1) @ W  ==  enc_p @ W[:E] + enc_c @ W[E:]  (no concat)
    h1 = (jnp.dot(enc_p, w_h1[0:E, :], preferred_element_type=f32)
          + jnp.dot(enc_c, w_h1[E:2 * E, :], preferred_element_type=f32)
          + vec[R_BH1:R_BH1 + 1, :E])
    h1 = _leaky_relu(h1)
    h2 = jnp.dot(h1, w_h2_ref[...], preferred_element_type=f32) + vec[R_BH2:R_BH2 + 1, :E2]
    h2 = _leaky_relu(h2)
    # third linear as (1,E2) x (BS,E2)^T contraction -> lane-dense (1, BS) row
    logits = jax.lax.dot_general(w_h3_ref[...], h2, (((1,), (1,)), ((), ())),
                                 preferred_element_type=f32) + vec[R_BH3:R_BH3 + 1, 0:BS]
    # numerically stable sigmoid
    en = jnp.exp(-jnp.abs(logits))
    out_ref[...] = jnp.where(logits >= 0.0, 1.0 / (1.0 + en), en / (1.0 + en))


def transformer_discriminator(src, trg, params):
    """src: (B,S) int32 token ids. trg: (B,S,V) float distributions. -> (B,S,1)."""
    # Host-side glue (tiny XLA ops): stack streams, build the additive attention
    # bias that fuses the block-diagonal sequence mask with key-padding masks.
    src_oh = jax.nn.one_hot(src, V, dtype=jnp.float32).reshape(B * S, V)
    trg_f = trg.reshape(B * S, V).astype(jnp.float32)
    x_in = jnp.concatenate([src_oh, trg_f], axis=0)                      # (N, V)

    pad_oh = jax.nn.one_hot(PAD_IDX, V, dtype=trg.dtype)
    pad_p = (src == PAD_IDX).reshape(-1)                                 # (B*S,)
    # exact float equality matches the reference (trg == one_hot(pad)).all(-1)
    pad_c = jnp.all(trg == pad_oh, axis=-1).reshape(-1)                  # (B*S,)
    key_pad = jnp.concatenate([pad_p, pad_c], axis=0)                    # (N,)
    seq_id = jnp.arange(N, dtype=jnp.int32) // S                         # 2*B sequences
    bias = jnp.where((seq_id[:, None] != seq_id[None, :]) | key_pad[None, :],
                     NEG, 0.0).astype(jnp.float32)                       # (N, N)

    out = pl.pallas_call(
        discriminator_kernel,
        out_shape=jax.ShapeDtypeStruct((1, B * S), jnp.float32),
    )(x_in, bias, params["pos"], params["w_emb"], params["w_qkv"], params["w_o"],
      params["w_f1"], params["w_f2"], params["w_h1"], params["w_h2"], params["w_h3"],
      params["vec"])
    return out.reshape(B, S, 1)


def init_params(key):
    ks = jax.random.split(key, 40)

    def n(i, shape, scale=0.1):
        return scale * jax.random.normal(ks[i], shape, dtype=jnp.float32)

    w_emb = n(0, (V, E))
    pos = n(1, (S, E))
    wq, wk, wv, wo = n(2, (E, E)), n(3, (E, E)), n(4, (E, E)), n(5, (E, E))
    bq, bk, bv, bo = n(6, (E,), 0.02), n(7, (E,), 0.02), n(8, (E,), 0.02), n(9, (E,), 0.02)
    ln1g, ln1b = 1.0 + n(10, (E,), 0.01), n(11, (E,), 0.01)
    w_f1, b_f1 = n(12, (E, F)), n(13, (F,), 0.02)
    w_f2, b_f2 = n(14, (F, E)), n(15, (E,), 0.02)
    ln2g, ln2b = 1.0 + n(16, (E,), 0.01), n(17, (E,), 0.01)

    def bn(i, c):
        gamma = 1.0 + 0.05 * jax.random.normal(ks[i], (c,), dtype=jnp.float32)
        beta = 0.05 * jax.random.normal(ks[i + 1], (c,), dtype=jnp.float32)
        mean = 0.05 * jax.random.normal(ks[i + 2], (c,), dtype=jnp.float32)
        var = 1.0 + 0.1 * jnp.abs(jax.random.normal(ks[i + 3], (c,), dtype=jnp.float32))
        return gamma, beta, mean, var

    bn1 = bn(18, 2 * E)
    l1w, l1b = n(22, (2 * E, E)), n(23, (E,), 0.02)
    bn2 = bn(24, E)
    l2w, l2b = n(28, (E, E2)), n(29, (E2,), 0.02)
    bn3 = bn(30, E2)
    l3w, l3b = n(34, (E2, 1)), n(35, (1,), 0.02)

    # ----- init-time constant folding: eval BatchNorm -> following Linear -----
    def fold_bn(bn_params, w, b):
        gamma, beta, mean, var = bn_params
        s = gamma * jax.lax.rsqrt(var + EPS_BN)
        t = beta - mean * s
        return s[:, None] * w, t @ w + b

    w_h1, b_h1 = fold_bn(bn1, l1w, l1b)          # (2E, E), (E,)
    w_h2, b_h2 = fold_bn(bn2, l2w, l2b)          # (E, E2), (E2,)
    w_h3f, b_h3 = fold_bn(bn3, l3w, l3b)         # (E2, 1), (1,)
    w_h3 = w_h3f.T                               # (1, E2) row vector

    # ----- fuse QKV, tile positions, pack all small vectors into one array -----
    w_qkv = jnp.concatenate([wq, wk, wv], axis=1)          # (E, 3E)
    b_qkv = jnp.concatenate([bq, bk, bv], axis=0)          # (3E,)
    pos_tiled = jnp.tile(pos, (2 * B, 1))                  # (N, E)

    def pad_row(vv):
        return jnp.pad(vv, (0, 3 * E - vv.shape[0]))

    vec = jnp.stack([
        pad_row(b_qkv),                                    # R_BQKV
        pad_row(bo),                                       # R_BO
        pad_row(ln1g), pad_row(ln1b),                      # R_LN1G, R_LN1B
        pad_row(b_f1), pad_row(b_f2),                      # R_BF1, R_BF2
        pad_row(ln2g), pad_row(ln2b),                      # R_LN2G, R_LN2B
        pad_row(b_h1), pad_row(b_h2),                      # R_BH1, R_BH2
        jnp.full((3 * E,), b_h3[0], dtype=jnp.float32),    # R_BH3 (broadcast scalar)
    ])                                                     # (11, 3E)

    return dict(pos=pos_tiled, w_emb=w_emb, w_qkv=w_qkv, w_o=wo,
                w_f1=w_f1, w_f2=w_f2, w_h1=w_h1, w_h2=w_h2, w_h3=w_h3, vec=vec)


if __name__ == "__main__":
    key = jax.random.PRNGKey(0)
    kp, ksrc, ktrg = jax.random.split(key, 3)
    params = init_params(kp)

    # parent token ids, with some (but never all) positions set to the pad idx
    src = jax.random.randint(ksrc, (B, S), 0, V, dtype=jnp.int32)
    src = src.at[:, 0].set(jnp.maximum(src[:, 0], 1))   # guarantee a non-pad key
    src = src.at[:, -1].set(PAD_IDX)

    # child "soft one-hot" distribution; one exact pad one-hot row to exercise mask
    trg = jax.nn.softmax(jax.random.normal(ktrg, (B, S, V), dtype=jnp.float32), axis=-1)
    trg = trg.at[0, -1, :].set(jax.nn.one_hot(PAD_IDX, V, dtype=jnp.float32))

    # TODO(synk): dropout is inference-mode identity; the injected
    # nn.TransformerEncoder is assumed to be 1 post-norm layer (4 heads, relu,
    # FFN=64) since its config is not given; BatchNorm1d uses eval-mode running
    # stats (folded into the following Linear layers at init time).
    fwd = jax.jit(transformer_discriminator)
    out = jax.block_until_ready(fwd(src, trg, params))
    assert out.shape == (B, S, 1)
    assert bool(jnp.all(jnp.isfinite(out)))
    assert bool(jnp.all((out > 0.0) & (out < 1.0)))
    print("KERNEL_OK")
</pallas_src>

<mosaic_0001>
module attributes {stable_mosaic.version = 11 : i64} {
  func.func @discriminator_kernel(%arg0: memref<32x16xf32, #tpu.memory_space<vmem>>, %arg1: memref<32x32xf32, #tpu.memory_space<vmem>>, %arg2: memref<32x32xf32, #tpu.memory_space<vmem>>, %arg3: memref<16x32xf32, #tpu.memory_space<vmem>>, %arg4: memref<32x96xf32, #tpu.memory_space<vmem>>, %arg5: memref<32x32xf32, #tpu.memory_space<vmem>>, %arg6: memref<32x64xf32, #tpu.memory_space<vmem>>, %arg7: memref<64x32xf32, #tpu.memory_space<vmem>>, %arg8: memref<64x32xf32, #tpu.memory_space<vmem>>, %arg9: memref<32x16xf32, #tpu.memory_space<vmem>>, %arg10: memref<1x16xf32, #tpu.memory_space<vmem>>, %arg11: memref<11x96xf32, #tpu.memory_space<vmem>>, %arg12: memref<1x16xf32, #tpu.memory_space<vmem>>) attributes {dimension_semantics = [], scalar_prefetch = 0 : i64, scratch_operands = 0 : i64, tpu.core_type = #tpu.core_type<tc>} {
    %c0 = arith.constant 0 : index
    %c0_0 = arith.constant 0 : index
    %0 = vector.load %arg11[%c0, %c0_0] : memref<11x96xf32, #tpu.memory_space<vmem>>, vector<11x96xf32>
    %c0_1 = arith.constant 0 : index
    %c0_2 = arith.constant 0 : index
    %1 = vector.load %arg1[%c0_1, %c0_2] : memref<32x32xf32, #tpu.memory_space<vmem>>, vector<32x32xf32>
    %c0_3 = arith.constant 0 : index
    %c0_4 = arith.constant 0 : index
    %2 = vector.load %arg0[%c0_3, %c0_4] : memref<32x16xf32, #tpu.memory_space<vmem>>, vector<32x16xf32>
    %c0_5 = arith.constant 0 : index
    %c0_6 = arith.constant 0 : index
    %3 = vector.load %arg3[%c0_5, %c0_6] : memref<16x32xf32, #tpu.memory_space<vmem>>, vector<16x32xf32>
    %cst = arith.constant dense<0.000000e+00> : vector<32x32xf32>
    %4 = tpu.matmul %2, %3, %cst {dimension_numbers = #tpu.dot_dimension_numbers<[1], [0], [0], [1], [0, 0, 1, 1], [], []>} : vector<32x16xf32>, vector<16x32xf32>, vector<32x32xf32> -> vector<32x32xf32>
    %c0_7 = arith.constant 0 : index
    %c0_8 = arith.constant 0 : index
    %5 = vector.load %arg2[%c0_7, %c0_8] : memref<32x32xf32, #tpu.memory_space<vmem>>, vector<32x32xf32>
    %6 = arith.addf %4, %5 : vector<32x32xf32>
    %c0_9 = arith.constant 0 : index
    %c0_10 = arith.constant 0 : index
    %7 = vector.load %arg4[%c0_9, %c0_10] : memref<32x96xf32, #tpu.memory_space<vmem>>, vector<32x96xf32>
    %cst_11 = arith.constant dense<0.000000e+00> : vector<32x96xf32>
    %8 = tpu.matmul %6, %7, %cst_11 {dimension_numbers = #tpu.dot_dimension_numbers<[1], [0], [0], [1], [0, 0, 1, 1], [], []>} : vector<32x32xf32>, vector<32x96xf32>, vector<32x96xf32> -> vector<32x96xf32>
    %9 = vector.extract_strided_slice %0 {offsets = [0, 0], sizes = [1, 96], strides = [1, 1]} : vector<11x96xf32> to vector<1x96xf32>
    %10 = vector.broadcast %9 : vector<1x96xf32> to vector<32x96xf32>
    %11 = arith.addf %8, %10 : vector<32x96xf32>
    %12 = vector.extract_strided_slice %11 {offsets = [0, 0], sizes = [32, 32], strides = [1, 1]} : vector<32x96xf32> to vector<32x32xf32>
    %13 = vector.extract_strided_slice %11 {offsets = [0, 32], sizes = [32, 32], strides = [1, 1]} : vector<32x96xf32> to vector<32x32xf32>
    %14 = vector.extract_strided_slice %11 {offsets = [0, 64], sizes = [32, 32], strides = [1, 1]} : vector<32x96xf32> to vector<32x32xf32>
    %c0_12 = arith.constant 0 : index
    %c0_13 = arith.constant 0 : index
    %15 = vector.load %arg5[%c0_12, %c0_13] : memref<32x32xf32, #tpu.memory_space<vmem>>, vector<32x32xf32>
    %16 = vector.extract_strided_slice %12 {offsets = [0, 0], sizes = [32, 8], strides = [1, 1]} : vector<32x32xf32> to vector<32x8xf32>
    %17 = vector.extract_strided_slice %13 {offsets = [0, 0], sizes = [32, 8], strides = [1, 1]} : vector<32x32xf32> to vector<32x8xf32>
    %18 = vector.extract_strided_slice %14 {offsets = [0, 0], sizes = [32, 8], strides = [1, 1]} : vector<32x32xf32> to vector<32x8xf32>
    %cst_14 = arith.constant dense<0.000000e+00> : vector<32x32xf32>
    %19 = tpu.matmul %16, %17, %cst_14 {dimension_numbers = #tpu.dot_dimension_numbers<[1], [1], [0], [0], [0, 0, 1, 0], [], []>} : vector<32x8xf32>, vector<32x8xf32>, vector<32x32xf32> -> vector<32x32xf32>
    %cst_15 = arith.constant 0.353553385 : f32
    %20 = vector.broadcast %cst_15 : f32 to vector<32x32xf32>
    %21 = arith.mulf %19, %20 : vector<32x32xf32>
    %22 = arith.addf %21, %1 : vector<32x32xf32>
    %cst_16 = arith.constant dense<0xFF800000> : vector<32xf32>
    %23 = vector.multi_reduction <maximumf>, %22, %cst_16 [1] : vector<32x32xf32> to vector<32xf32>
    %24 = vector.shape_cast %23 : vector<32xf32> to vector<32x1xf32>
    %25 = vector.broadcast %24 : vector<32x1xf32> to vector<32x32xf32>
    %26 = arith.subf %22, %25 : vector<32x32xf32>
    %27 = math.exp %26 : vector<32x32xf32>
    %cst_17 = arith.constant dense<0.000000e+00> : vector<32xf32>
    %28 = vector.multi_reduction <add>, %27, %cst_17 [1] : vector<32x32xf32> to vector<32xf32>
    %29 = vector.shape_cast %28 : vector<32xf32> to vector<32x1xf32>
    %30 = tpu.reciprocal %29 {approx = true} : vector<32x1xf32> -> vector<32x1xf32>
    %31 = vector.broadcast %30 : vector<32x1xf32> to vector<32x32xf32>
    %32 = arith.mulf %27, %31 : vector<32x32xf32>
    %cst_18 = arith.constant dense<0.000000e+00> : vector<32x8xf32>
    %33 = tpu.matmul %32, %18, %cst_18 {dimension_numbers = #tpu.dot_dimension_numbers<[1], [0], [0], [1], [0, 0, 1, 1], [], []>} : vector<32x32xf32>, vector<32x8xf32>, vector<32x8xf32> -> vector<32x8xf32>
    %34 = vector.extract_strided_slice %15 {offsets = [0, 0], sizes = [8, 32], strides = [1, 1]} : vector<32x32xf32> to vector<8x32xf32>
    %cst_19 = arith.constant dense<0.000000e+00> : vector<32x32xf32>
    %35 = tpu.matmul %33, %34, %cst_19 {dimension_numbers = #tpu.dot_dimension_numbers<[1], [0], [0], [1], [0, 0, 1, 1], [], []>} : vector<32x8xf32>, vector<8x32xf32>, vector<32x32xf32> -> vector<32x32xf32>
    %36 = vector.extract_strided_slice %12 {offsets = [0, 8], sizes = [32, 8], strides = [1, 1]} : vector<32x32xf32> to vector<32x8xf32>
    %37 = vector.extract_strided_slice %13 {offsets = [0, 8], sizes = [32, 8], strides = [1, 1]} : vector<32x32xf32> to vector<32x8xf32>
    %38 = vector.extract_strided_slice %14 {offsets = [0, 8], sizes = [32, 8], strides = [1, 1]} : vector<32x32xf32> to vector<32x8xf32>
    %cst_20 = arith.constant dense<0.000000e+00> : vector<32x32xf32>
    %39 = tpu.matmul %36, %37, %cst_20 {dimension_numbers = #tpu.dot_dimension_numbers<[1], [1], [0], [0], [0, 0, 1, 0], [], []>} : vector<32x8xf32>, vector<32x8xf32>, vector<32x32xf32> -> vector<32x32xf32>
    %cst_21 = arith.constant 0.353553385 : f32
    %40 = vector.broadcast %cst_21 : f32 to vector<32x32xf32>
    %41 = arith.mulf %39, %40 : vector<32x32xf32>
    %42 = arith.addf %41, %1 : vector<32x32xf32>
    %cst_22 = arith.constant dense<0xFF800000> : vector<32xf32>
    %43 = vector.multi_reduction <maximumf>, %42, %cst_22 [1] : vector<32x32xf32> to vector<32xf32>
    %44 = vector.shape_cast %43 : vector<32xf32> to vector<32x1xf32>
    %45 = vector.broadcast %44 : vector<32x1xf32> to vector<32x32xf32>
    %46 = arith.subf %42, %45 : vector<32x32xf32>
    %47 = math.exp %46 : vector<32x32xf32>
    %cst_23 = arith.constant dense<0.000000e+00> : vector<32xf32>
    %48 = vector.multi_reduction <add>, %47, %cst_23 [1] : vector<32x32xf32> to vector<32xf32>
    %49 = vector.shape_cast %48 : vector<32xf32> to vector<32x1xf32>
    %50 = tpu.reciprocal %49 {approx = true} : vector<32x1xf32> -> vector<32x1xf32>
    %51 = vector.broadcast %50 : vector<32x1xf32> to vector<32x32xf32>
    %52 = arith.mulf %47, %51 : vector<32x32xf32>
    %cst_24 = arith.constant dense<0.000000e+00> : vector<32x8xf32>
    %53 = tpu.matmul %52, %38, %cst_24 {dimension_numbers = #tpu.dot_dimension_numbers<[1], [0], [0], [1], [0, 0, 1, 1], [], []>} : vector<32x32xf32>, vector<32x8xf32>, vector<32x8xf32> -> vector<32x8xf32>
    %54 = vector.extract_strided_slice %15 {offsets = [8, 0], sizes = [8, 32], strides = [1, 1]} : vector<32x32xf32> to vector<8x32xf32>
    %cst_25 = arith.constant dense<0.000000e+00> : vector<32x32xf32>
    %55 = tpu.matmul %53, %54, %cst_25 {dimension_numbers = #tpu.dot_dimension_numbers<[1], [0], [0], [1], [0, 0, 1, 1], [], []>} : vector<32x8xf32>, vector<8x32xf32>, vector<32x32xf32> -> vector<32x32xf32>
    %56 = arith.addf %35, %55 : vector<32x32xf32>
    %57 = vector.extract_strided_slice %12 {offsets = [0, 16], sizes = [32, 8], strides = [1, 1]} : vector<32x32xf32> to vector<32x8xf32>
    %58 = vector.extract_strided_slice %13 {offsets = [0, 16], sizes = [32, 8], strides = [1, 1]} : vector<32x32xf32> to vector<32x8xf32>
    %59 = vector.extract_strided_slice %14 {offsets = [0, 16], sizes = [32, 8], strides = [1, 1]} : vector<32x32xf32> to vector<32x8xf32>
    %cst_26 = arith.constant dense<0.000000e+00> : vector<32x32xf32>
    %60 = tpu.matmul %57, %58, %cst_26 {dimension_numbers = #tpu.dot_dimension_numbers<[1], [1], [0], [0], [0, 0, 1, 0], [], []>} : vector<32x8xf32>, vector<32x8xf32>, vector<32x32xf32> -> vector<32x32xf32>
    %cst_27 = arith.constant 0.353553385 : f32
    %61 = vector.broadcast %cst_27 : f32 to vector<32x32xf32>
    %62 = arith.mulf %60, %61 : vector<32x32xf32>
    %63 = arith.addf %62, %1 : vector<32x32xf32>
    %cst_28 = arith.constant dense<0xFF800000> : vector<32xf32>
    %64 = vector.multi_reduction <maximumf>, %63, %cst_28 [1] : vector<32x32xf32> to vector<32xf32>
    %65 = vector.shape_cast %64 : vector<32xf32> to vector<32x1xf32>
    %66 = vector.broadcast %65 : vector<32x1xf32> to vector<32x32xf32>
    %67 = arith.subf %63, %66 : vector<32x32xf32>
    %68 = math.exp %67 : vector<32x32xf32>
    %cst_29 = arith.constant dense<0.000000e+00> : vector<32xf32>
    %69 = vector.multi_reduction <add>, %68, %cst_29 [1] : vector<32x32xf32> to vector<32xf32>
    %70 = vector.shape_cast %69 : vector<32xf32> to vector<32x1xf32>
    %71 = tpu.reciprocal %70 {approx = true} : vector<32x1xf32> -> vector<32x1xf32>
    %72 = vector.broadcast %71 : vector<32x1xf32> to vector<32x32xf32>
    %73 = arith.mulf %68, %72 : vector<32x32xf32>
    %cst_30 = arith.constant dense<0.000000e+00> : vector<32x8xf32>
    %74 = tpu.matmul %73, %59, %cst_30 {dimension_numbers = #tpu.dot_dimension_numbers<[1], [0], [0], [1], [0, 0, 1, 1], [], []>} : vector<32x32xf32>, vector<32x8xf32>, vector<32x8xf32> -> vector<32x8xf32>
    %75 = vector.extract_strided_slice %15 {offsets = [16, 0], sizes = [8, 32], strides = [1, 1]} : vector<32x32xf32> to vector<8x32xf32>
    %cst_31 = arith.constant dense<0.000000e+00> : vector<32x32xf32>
    %76 = tpu.matmul %74, %75, %cst_31 {dimension_numbers = #tpu.dot_dimension_numbers<[1], [0], [0], [1], [0, 0, 1, 1], [], []>} : vector<32x8xf32>, vector<8x32xf32>, vector<32x32xf32> -> vector<32x32xf32>
    %77 = arith.addf %56, %76 : vector<32x32xf32>
    %78 = vector.extract_strided_slice %12 {offsets = [0, 24], sizes = [32, 8], strides = [1, 1]} : vector<32x32xf32> to vector<32x8xf32>
    %79 = vector.extract_strided_slice %13 {offsets = [0, 24], sizes = [32, 8], strides = [1, 1]} : vector<32x32xf32> to vector<32x8xf32>
    %80 = vector.extract_strided_slice %14 {offsets = [0, 24], sizes = [32, 8], strides = [1, 1]} : vector<32x32xf32> to vector<32x8xf32>
    %cst_32 = arith.constant dense<0.000000e+00> : vector<32x32xf32>
    %81 = tpu.matmul %78, %79, %cst_32 {dimension_numbers = #tpu.dot_dimension_numbers<[1], [1], [0], [0], [0, 0, 1, 0], [], []>} : vector<32x8xf32>, vector<32x8xf32>, vector<32x32xf32> -> vector<32x32xf32>
    %cst_33 = arith.constant 0.353553385 : f32
    %82 = vector.broadcast %cst_33 : f32 to vector<32x32xf32>
    %83 = arith.mulf %81, %82 : vector<32x32xf32>
    %84 = arith.addf %83, %1 : vector<32x32xf32>
    %cst_34 = arith.constant dense<0xFF800000> : vector<32xf32>
    %85 = vector.multi_reduction <maximumf>, %84, %cst_34 [1] : vector<32x32xf32> to vector<32xf32>
    %86 = vector.shape_cast %85 : vector<32xf32> to vector<32x1xf32>
    %87 = vector.broadcast %86 : vector<32x1xf32> to vector<32x32xf32>
    %88 = arith.subf %84, %87 : vector<32x32xf32>
    %89 = math.exp %88 : vector<32x32xf32>
    %cst_35 = arith.constant dense<0.000000e+00> : vector<32xf32>
    %90 = vector.multi_reduction <add>, %89, %cst_35 [1] : vector<32x32xf32> to vector<32xf32>
    %91 = vector.shape_cast %90 : vector<32xf32> to vector<32x1xf32>
    %92 = tpu.reciprocal %91 {approx = true} : vector<32x1xf32> -> vector<32x1xf32>
    %93 = vector.broadcast %92 : vector<32x1xf32> to vector<32x32xf32>
    %94 = arith.mulf %89, %93 : vector<32x32xf32>
    %cst_36 = arith.constant dense<0.000000e+00> : vector<32x8xf32>
    %95 = tpu.matmul %94, %80, %cst_36 {dimension_numbers = #tpu.dot_dimension_numbers<[1], [0], [0], [1], [0, 0, 1, 1], [], []>} : vector<32x32xf32>, vector<32x8xf32>, vector<32x8xf32> -> vector<32x8xf32>
    %96 = vector.extract_strided_slice %15 {offsets = [24, 0], sizes = [8, 32], strides = [1, 1]} : vector<32x32xf32> to vector<8x32xf32>
    %cst_37 = arith.constant dense<0.000000e+00> : vector<32x32xf32>
    %97 = tpu.matmul %95, %96, %cst_37 {dimension_numbers = #tpu.dot_dimension_numbers<[1], [0], [0], [1], [0, 0, 1, 1], [], []>} : vector<32x8xf32>, vector<8x32xf32>, vector<32x32xf32> -> vector<32x32xf32>
    %98 = arith.addf %77, %97 : vector<32x32xf32>
    %99 = vector.extract_strided_slice %0 {offsets = [1, 0], sizes = [1, 32], strides = [1, 1]} : vector<11x96xf32> to vector<1x32xf32>
    %100 = vector.broadcast %99 : vector<1x32xf32> to vector<32x32xf32>
    %101 = arith.addf %98, %100 : vector<32x32xf32>
    %102 = arith.addf %6, %101 : vector<32x32xf32>
    %103 = vector.extract_strided_slice %0 {offsets = [2, 0], sizes = [1, 32], strides = [1, 1]} : vector<11x96xf32> to vector<1x32xf32>
    %104 = vector.extract_strided_slice %0 {offsets = [3, 0], sizes = [1, 32], strides = [1, 1]} : vector<11x96xf32> to vector<1x32xf32>
    %cst_38 = arith.constant dense<0.000000e+00> : vector<32xf32>
    %105 = vector.multi_reduction <add>, %102, %cst_38 [1] : vector<32x32xf32> to vector<32xf32>
    %106 = vector.shape_cast %105 : vector<32xf32> to vector<32x1xf32>
    %cst_39 = arith.constant 3.200000e+01 : f32
    %107 = vector.broadcast %cst_39 : f32 to vector<32x1xf32>
    %108 = arith.divf %106, %107 : vector<32x1xf32>
    %109 = vector.broadcast %108 : vector<32x1xf32> to vector<32x32xf32>
    %110 = arith.subf %102, %109 : vector<32x32xf32>
    %111 = arith.mulf %110, %110 : vector<32x32xf32>
    %cst_40 = arith.constant dense<0.000000e+00> : vector<32xf32>
    %112 = vector.multi_reduction <add>, %111, %cst_40 [1] : vector<32x32xf32> to vector<32xf32>
    %113 = vector.shape_cast %112 : vector<32xf32> to vector<32x1xf32>
    %cst_41 = arith.constant 3.200000e+01 : f32
    %114 = vector.broadcast %cst_41 : f32 to vector<32x1xf32>
    %115 = arith.divf %113, %114 : vector<32x1xf32>
    %116 = vector.broadcast %108 : vector<32x1xf32> to vector<32x32xf32>
    %117 = arith.subf %102, %116 : vector<32x32xf32>
    %cst_42 = arith.constant 9.99999974E-6 : f32
    %118 = vector.broadcast %cst_42 : f32 to vector<32x1xf32>
    %119 = arith.addf %115, %118 : vector<32x1xf32>
    %120 = math.rsqrt %119 : vector<32x1xf32>
    %121 = vector.broadcast %120 : vector<32x1xf32> to vector<32x32xf32>
    %122 = arith.mulf %117, %121 : vector<32x32xf32>
    %123 = vector.broadcast %103 : vector<1x32xf32> to vector<32x32xf32>
    %124 = arith.mulf %122, %123 : vector<32x32xf32>
    %125 = vector.broadcast %104 : vector<1x32xf32> to vector<32x32xf32>
    %126 = arith.addf %124, %125 : vector<32x32xf32>
    %c0_43 = arith.constant 0 : index
    %c0_44 = arith.constant 0 : index
    %127 = vector.load %arg6[%c0_43, %c0_44] : memref<32x64xf32, #tpu.memory_space<vmem>>, vector<32x64xf32>
    %cst_45 = arith.constant dense<0.000000e+00> : vector<32x64xf32>
    %128 = tpu.matmul %126, %127, %cst_45 {dimension_numbers = #tpu.dot_dimension_numbers<[1], [0], [0], [1], [0, 0, 1, 1], [], []>} : vector<32x32xf32>, vector<32x64xf32>, vector<32x64xf32> -> vector<32x64xf32>
    %129 = vector.extract_strided_slice %0 {offsets = [4, 0], sizes = [1, 64], strides = [1, 1]} : vector<11x96xf32> to vector<1x64xf32>
    %130 = vector.broadcast %129 : vector<1x64xf32> to vector<32x64xf32>
    %131 = arith.addf %128, %130 : vector<32x64xf32>
    %cst_46 = arith.constant 0.000000e+00 : f32
    %132 = vector.broadcast %cst_46 : f32 to vector<32x64xf32>
    %133 = arith.maximumf %131, %132 : vector<32x64xf32>
    %c0_47 = arith.constant 0 : index
    %c0_48 = arith.constant 0 : index
    %134 = vector.load %arg7[%c0_47, %c0_48] : memref<64x32xf32, #tpu.memory_space<vmem>>, vector<64x32xf32>
    %cst_49 = arith.constant dense<0.000000e+00> : vector<32x32xf32>
    %135 = tpu.matmul %133, %134, %cst_49 {dimension_numbers = #tpu.dot_dimension_numbers<[1], [0], [0], [1], [0, 0, 1, 1], [], []>} : vector<32x64xf32>, vector<64x32xf32>, vector<32x32xf32> -> vector<32x32xf32>
    %136 = vector.extract_strided_slice %0 {offsets = [5, 0], sizes = [1, 32], strides = [1, 1]} : vector<11x96xf32> to vector<1x32xf32>
    %137 = vector.broadcast %136 : vector<1x32xf32> to vector<32x32xf32>
    %138 = arith.addf %135, %137 : vector<32x32xf32>
    %139 = arith.addf %126, %138 : vector<32x32xf32>
    %140 = vector.extract_strided_slice %0 {offsets = [6, 0], sizes = [1, 32], strides = [1, 1]} : vector<11x96xf32> to vector<1x32xf32>
    %141 = vector.extract_strided_slice %0 {offsets = [7, 0], sizes = [1, 32], strides = [1, 1]} : vector<11x96xf32> to vector<1x32xf32>
    %cst_50 = arith.constant dense<0.000000e+00> : vector<32xf32>
    %142 = vector.multi_reduction <add>, %139, %cst_50 [1] : vector<32x32xf32> to vector<32xf32>
    %143 = vector.shape_cast %142 : vector<32xf32> to vector<32x1xf32>
    %cst_51 = arith.constant 3.200000e+01 : f32
    %144 = vector.broadcast %cst_51 : f32 to vector<32x1xf32>
    %145 = arith.divf %143, %144 : vector<32x1xf32>
    %146 = vector.broadcast %145 : vector<32x1xf32> to vector<32x32xf32>
    %147 = arith.subf %139, %146 : vector<32x32xf32>
    %148 = arith.mulf %147, %147 : vector<32x32xf32>
    %cst_52 = arith.constant dense<0.000000e+00> : vector<32xf32>
    %149 = vector.multi_reduction <add>, %148, %cst_52 [1] : vector<32x32xf32> to vector<32xf32>
    %150 = vector.shape_cast %149 : vector<32xf32> to vector<32x1xf32>
    %cst_53 = arith.constant 3.200000e+01 : f32
    %151 = vector.broadcast %cst_53 : f32 to vector<32x1xf32>
    %152 = arith.divf %150, %151 : vector<32x1xf32>
    %153 = vector.broadcast %145 : vector<32x1xf32> to vector<32x32xf32>
    %154 = arith.subf %139, %153 : vector<32x32xf32>
    %cst_54 = arith.constant 9.99999974E-6 : f32
    %155 = vector.broadcast %cst_54 : f32 to vector<32x1xf32>
    %156 = arith.addf %152, %155 : vector<32x1xf32>
    %157 = math.rsqrt %156 : vector<32x1xf32>
    %158 = vector.broadcast %157 : vector<32x1xf32> to vector<32x32xf32>
    %159 = arith.mulf %154, %158 : vector<32x32xf32>
    %160 = vector.broadcast %140 : vector<1x32xf32> to vector<32x32xf32>
    %161 = arith.mulf %159, %160 : vector<32x32xf32>
    %162 = vector.broadcast %141 : vector<1x32xf32> to vector<32x32xf32>
    %163 = arith.addf %161, %162 : vector<32x32xf32>
    %164 = vector.extract_strided_slice %163 {offsets = [0, 0], sizes = [16, 32], strides = [1, 1]} : vector<32x32xf32> to vector<16x32xf32>
    %165 = vector.extract_strided_slice %163 {offsets = [16, 0], sizes = [16, 32], strides = [1, 1]} : vector<32x32xf32> to vector<16x32xf32>
    %c0_55 = arith.constant 0 : index
    %c0_56 = arith.constant 0 : index
    %166 = vector.load %arg8[%c0_55, %c0_56] : memref<64x32xf32, #tpu.memory_space<vmem>>, vector<64x32xf32>
    %167 = vector.extract_strided_slice %166 {offsets = [0, 0], sizes = [32, 32], strides = [1, 1]} : vector<64x32xf32> to vector<32x32xf32>
    %cst_57 = arith.constant dense<0.000000e+00> : vector<16x32xf32>
    %168 = tpu.matmul %164, %167, %cst_57 {dimension_numbers = #tpu.dot_dimension_numbers<[1], [0], [0], [1], [0, 0, 1, 1], [], []>} : vector<16x32xf32>, vector<32x32xf32>, vector<16x32xf32> -> vector<16x32xf32>
    %169 = vector.extract_strided_slice %166 {offsets = [32, 0], sizes = [32, 32], strides = [1, 1]} : vector<64x32xf32> to vector<32x32xf32>
    %cst_58 = arith.constant dense<0.000000e+00> : vector<16x32xf32>
    %170 = tpu.matmul %165, %169, %cst_58 {dimension_numbers = #tpu.dot_dimension_numbers<[1], [0], [0], [1], [0, 0, 1, 1], [], []>} : vector<16x32xf32>, vector<32x32xf32>, vector<16x32xf32> -> vector<16x32xf32>
    %171 = arith.addf %168, %170 : vector<16x32xf32>
    %172 = vector.extract_strided_slice %0 {offsets = [8, 0], sizes = [1, 32], strides = [1, 1]} : vector<11x96xf32> to vector<1x32xf32>
    %173 = vector.broadcast %172 : vector<1x32xf32> to vector<16x32xf32>
    %174 = arith.addf %171, %173 : vector<16x32xf32>
    %cst_59 = arith.constant 0.000000e+00 : f32
    %175 = vector.broadcast %cst_59 : f32 to vector<16x32xf32>
    %176 = arith.cmpf oge, %174, %175 : vector<16x32xf32>
    %cst_60 = arith.constant 0.00999999977 : f32
    %177 = vector.broadcast %cst_60 : f32 to vector<16x32xf32>
    %178 = arith.mulf %177, %174 : vector<16x32xf32>
    %179 = arith.select %176, %174, %178 : vector<16x32xi1>, vector<16x32xf32>
    %c0_61 = arith.constant 0 : index
    %c0_62 = arith.constant 0 : index
    %180 = vector.load %arg9[%c0_61, %c0_62] : memref<32x16xf32, #tpu.memory_space<vmem>>, vector<32x16xf32>
    %cst_63 = arith.constant dense<0.000000e+00> : vector<16x16xf32>
    %181 = tpu.matmul %179, %180, %cst_63 {dimension_numbers = #tpu.dot_dimension_numbers<[1], [0], [0], [1], [0, 0, 1, 1], [], []>} : vector<16x32xf32>, vector<32x16xf32>, vector<16x16xf32> -> vector<16x16xf32>
    %182 = vector.extract_strided_slice %0 {offsets = [9, 0], sizes = [1, 16], strides = [1, 1]} : vector<11x96xf32> to vector<1x16xf32>
    %183 = vector.broadcast %182 : vector<1x16xf32> to vector<16x16xf32>
    %184 = arith.addf %181, %183 : vector<16x16xf32>
    %cst_64 = arith.constant 0.000000e+00 : f32
    %185 = vector.broadcast %cst_64 : f32 to vector<16x16xf32>
    %186 = arith.cmpf oge, %184, %185 : vector<16x16xf32>
    %cst_65 = arith.constant 0.00999999977 : f32
    %187 = vector.broadcast %cst_65 : f32 to vector<16x16xf32>
    %188 = arith.mulf %187, %184 : vector<16x16xf32>
    %189 = arith.select %186, %184, %188 : vector<16x16xi1>, vector<16x16xf32>
    %c0_66 = arith.constant 0 : index
    %c0_67 = arith.constant 0 : index
    %190 = vector.load %arg10[%c0_66, %c0_67] : memref<1x16xf32, #tpu.memory_space<vmem>>, vector<1x16xf32>
    %cst_68 = arith.constant dense<0.000000e+00> : vector<1x16xf32>
    %191 = tpu.matmul %190, %189, %cst_68 {dimension_numbers = #tpu.dot_dimension_numbers<[1], [1], [0], [0], [0, 0, 1, 0], [], []>} : vector<1x16xf32>, vector<16x16xf32>, vector<1x16xf32> -> vector<1x16xf32>
    %192 = vector.extract_strided_slice %0 {offsets = [10, 0], sizes = [1, 16], strides = [1, 1]} : vector<11x96xf32> to vector<1x16xf32>
    %193 = arith.addf %191, %192 : vector<1x16xf32>
    %194 = math.absf %193 : vector<1x16xf32>
    %cst_69 = arith.constant 0.000000e+00 : f32
    %195 = vector.broadcast %cst_69 : f32 to vector<1x16xf32>
    %196 = arith.subf %195, %194 : vector<1x16xf32>
    %197 = math.exp %196 : vector<1x16xf32>
    %cst_70 = arith.constant 0.000000e+00 : f32
    %198 = vector.broadcast %cst_70 : f32 to vector<1x16xf32>
    %199 = arith.cmpf oge, %193, %198 : vector<1x16xf32>
    %cst_71 = arith.constant 1.000000e+00 : f32
    %200 = vector.broadcast %cst_71 : f32 to vector<1x16xf32>
    %201 = arith.addf %200, %197 : vector<1x16xf32>
    %cst_72 = arith.constant 1.000000e+00 : f32
    %202 = vector.broadcast %cst_72 : f32 to vector<1x16xf32>
    %203 = arith.divf %202, %201 : vector<1x16xf32>
    %cst_73 = arith.constant 1.000000e+00 : f32
    %204 = vector.broadcast %cst_73 : f32 to vector<1x16xf32>
    %205 = arith.addf %204, %197 : vector<1x16xf32>
    %206 = arith.divf %197, %205 : vector<1x16xf32>
    %207 = arith.select %199, %203, %206 : vector<1x16xi1>, vector<1x16xf32>
    %c0_74 = arith.constant 0 : index
    %c0_75 = arith.constant 0 : index
    %208 = vector.load %arg12[%c0_74, %c0_75] : memref<1x16xf32, #tpu.memory_space<vmem>>, vector<1x16xf32>
    tpu.vector_store %arg12[%c0_74, %c0_75], %207 {strides = array<i32>} : memref<1x16xf32, #tpu.memory_space<vmem>>, vector<1x16xf32>,
    return
  }
}

</mosaic_0001>

<llo_original>
// kernel: transformer_discriminator.1
$region0: #{transformer_discriminator.1}
  #allocation0 [shape = 'u32[]', space=smem, size = 0x4, offset = 0x4, fixed_abs, tag = 'smem constant byte address 0x4 - core index']
  #allocation1 [shape = 'u32[144,128]{1,0:T(1,128)}', space=vmem, size = 0x12000, scoped, tag = 'internal scratch']
  %s0 = inlined_call_operand.vmem [shape: f32[32,16], index: 0, kind: input, shape index: {}]
  %s1 = inlined_call_operand.vmem [shape: f32[32,32], index: 1, kind: input, shape index: {}]
  %s2 = inlined_call_operand.vmem [shape: f32[32,32], index: 2, kind: input, shape index: {}]
  %s3 = inlined_call_operand.vmem [shape: f32[16,32], index: 3, kind: input, shape index: {}]
  %s4 = inlined_call_operand.vmem [shape: f32[32,96], index: 4, kind: input, shape index: {}]
  %s5 = inlined_call_operand.vmem [shape: f32[32,32], index: 5, kind: input, shape index: {}]
  %s6 = inlined_call_operand.vmem [shape: f32[32,64], index: 6, kind: input, shape index: {}]
  %s7 = inlined_call_operand.vmem [shape: f32[64,32], index: 7, kind: input, shape index: {}]
  %s8 = inlined_call_operand.vmem [shape: f32[64,32], index: 8, kind: input, shape index: {}]
  %s9 = inlined_call_operand.vmem [shape: f32[32,16], index: 9, kind: input, shape index: {}]
  %s10 = inlined_call_operand.vmem [shape: f32[1,16], index: 10, kind: input, shape index: {}]
  %s11 = inlined_call_operand.vmem [shape: f32[11,96], index: 11, kind: input, shape index: {}]
  %s12 = inlined_call_operand.vmem [shape: f32[1,16], index: 12, kind: output, shape index: {}]
  %s13 = sld [smem:[#allocation0]]
  $region58: #{transformer_discriminator.1} parent=0
    _
  %s15 = ssub.s32 1, %s13
  %s16 = scalar_select 0, %s15, %s13
  // Predicated region
  $region2: #{transformer_discriminator.1} parent=0 // pred_check
    _
  $region3: #{transformer_discriminator.1} parent=0 // pred_check_branch
    %18 = sbr.rel (0) target = $region5
  $region4: #{transformer_discriminator.1} parent=0 // pred_region
    _
  $region5: #{transformer_discriminator.1} parent=0 // pred_fallthru
    _
  // Predicated region
  $region6: #{transformer_discriminator.1} parent=0 // pred_check
    _
  $region7: #{transformer_discriminator.1} parent=0 // pred_check_branch
    %20 = sbr.rel (0) target = $region9
  $region8: #{transformer_discriminator.1} parent=0 // pred_region
    _
  $region9: #{transformer_discriminator.1} parent=0 // pred_fallthru
    _
  // Predicated region
  $region10: #{transformer_discriminator.1} parent=0 // pred_check
    _
  $region11: #{transformer_discriminator.1} parent=0 // pred_check_branch
    %22 = sbr.rel (0) target = $region13
  $region12: #{transformer_discriminator.1} parent=0 // pred_region
    _
  $region13: #{transformer_discriminator.1} parent=0 // pred_fallthru
    _
  // Predicated region
  $region14: #{transformer_discriminator.1} parent=0 // pred_check
    _
  $region15: #{transformer_discriminator.1} parent=0 // pred_check_branch
    %24 = sbr.rel (0) target = $region17
  $region16: #{transformer_discriminator.1} parent=0 // pred_region
    _
  $region17: #{transformer_discriminator.1} parent=0 // pred_fallthru
    _
  // Predicated region
  $region18: #{transformer_discriminator.1} parent=0 // pred_check
    _
  $region19: #{transformer_discriminator.1} parent=0 // pred_check_branch
    %26 = sbr.rel (0) target = $region21
  $region20: #{transformer_discriminator.1} parent=0 // pred_region
    _
  $region21: #{transformer_discriminator.1} parent=0 // pred_fallthru
    _
  // Predicated region
  $region22: #{transformer_discriminator.1} parent=0 // pred_check
    _
  $region23: #{transformer_discriminator.1} parent=0 // pred_check_branch
    %28 = sbr.rel (0) target = $region25
  $region24: #{transformer_discriminator.1} parent=0 // pred_region
    _
  $region25: #{transformer_discriminator.1} parent=0 // pred_fallthru
    _
  // Predicated region
  $region26: #{transformer_discriminator.1} parent=0 // pred_check
    _
  $region27: #{transformer_discriminator.1} parent=0 // pred_check_branch
    %30 = sbr.rel (0) target = $region29
  $region28: #{transformer_discriminator.1} parent=0 // pred_region
    _
  $region29: #{transformer_discriminator.1} parent=0 // pred_fallthru
    _
  // Predicated region
  $region30: #{transformer_discriminator.1} parent=0 // pred_check
    _
  $region31: #{transformer_discriminator.1} parent=0 // pred_check_branch
    %32 = sbr.rel (0) target = $region33
  $region32: #{transformer_discriminator.1} parent=0 // pred_region
    _
  $region33: #{transformer_discriminator.1} parent=0 // pred_fallthru
    _
  // Predicated region
  $region34: #{transformer_discriminator.1} parent=0 // pred_check
    _
  $region35: #{transformer_discriminator.1} parent=0 // pred_check_branch
    %34 = sbr.rel (0) target = $region37
  $region36: #{transformer_discriminator.1} parent=0 // pred_region
    _
  $region37: #{transformer_discriminator.1} parent=0 // pred_fallthru
    _
  // Predicated region
  $region38: #{transformer_discriminator.1} parent=0 // pred_check
    _
  $region39: #{transformer_discriminator.1} parent=0 // pred_check_branch
    %36 = sbr.rel (0) target = $region41
  $region40: #{transformer_discriminator.1} parent=0 // pred_region
    _
  $region41: #{transformer_discriminator.1} parent=0 // pred_fallthru
    _
  // Predicated region
  $region42: #{transformer_discriminator.1} parent=0 // pred_check
    _
  $region43: #{transformer_discriminator.1} parent=0 // pred_check_branch
    %38 = sbr.rel (0) target = $region45
  $region44: #{transformer_discriminator.1} parent=0 // pred_region
    _
  $region45: #{transformer_discriminator.1} parent=0 // pred_fallthru
    _
  // Predicated region
  $region46: #{transformer_discriminator.1} parent=0 // pred_check
    _
  $region47: #{transformer_discriminator.1} parent=0 // pred_check_branch
    %40 = sbr.rel (0) target = $region49
  $region48: #{transformer_discriminator.1} parent=0 // pred_region
    _
  $region49: #{transformer_discriminator.1} parent=0 // pred_fallthru
    _
  %v41 = vld [vmem:[%s11] sm:$0xff]
  %v42 = vld [vmem:[%s11 + $0x8] sm:$0x7]
  %v43 = vld [vmem:[%s1] sm:$0xff]
  %v44 = vld [vmem:[%s1 + $0x8] sm:$0xff]
  %v45 = vld [vmem:[%s1 + $0x10] sm:$0xff]
  %v46 = vld [vmem:[%s1 + $0x18] sm:$0xff]
  %v47 = vld [vmem:[%s0] sm:$0xff]
  %v48 = vld [vmem:[%s0 + $0x8] sm:$0xff]
  %v49 = vld [vmem:[%s0 + $0x10] sm:$0xff]
  %v50 = vld [vmem:[%s0 + $0x18] sm:$0xff]
  %v51 = vld [vmem:[%s3] sm:$0xff]
  %v52 = vld [vmem:[%s3 + $0x8] sm:$0xff]
  %v53 = vld [vmem:[%s2] sm:$0xff]
  %v54 = vld [vmem:[%s2 + $0x8] sm:$0xff]
  %v55 = vld [vmem:[%s2 + $0x10] sm:$0xff]
  %v56 = vld [vmem:[%s2 + $0x18] sm:$0xff]
  %vm57 = vcmask 130048
  %v59 = vsel %vm57, %v47, 0
  %v62 = vsel %vm57, %v48, 0
  %v65 = vsel %vm57, %v49, 0
  %v68 = vsel %vm57, %v50, 0
  %70 = vmatprep.subr.mxu0 0.0
  %71 = vmatpush1.msra.mxu0 %v51
  %72 = vmatprep.subr.mxu0 0.0
  %73 = vmatpush1.msra.mxu0 %v52
  %74 = vmatprep.subr.mxu0 0.0
  %75 = vmatpush1.msra.mxu0 0.0
  %76 = vmatprep.subr.mxu0 0.0
  %77 = vmatpush1.msra.mxu0 0.0
  %78 = vmatprep.subr.mxu0 0.0
  %79 = vmatpush1.msra.mxu0 0.0
  %80 = vmatprep.subr.mxu0 0.0
  %81 = vmatpush1.msra.mxu0 0.0
  %82 = vmatprep.subr.mxu0 0.0
  %83 = vmatpush1.msra.mxu0 0.0
  %84 = vmatprep.subr.mxu0 0.0
  %85 = vmatpush1.msra.mxu0 0.0
  %86 = vmatprep.subr.mxu0 0.0
  %87 = vmatpush1.msra.mxu0 0.0
  %88 = vmatprep.subr.mxu0 0.0
  %89 = vmatpush1.msra.mxu0 0.0
  %90 = vmatprep.subr.mxu0 0.0
  %91 = vmatpush1.msra.mxu0 0.0
  %92 = vmatprep.subr.mxu0 0.0
  %93 = vmatpush1.msra.mxu0 0.0
  %94 = vmatprep.subr.mxu0 0.0
  %95 = vmatpush1.msra.mxu0 0.0
  %96 = vmatprep.subr.mxu0 0.0
  %97 = vmatpush1.msra.mxu0 0.0
  %98 = vmatprep.subr.mxu0 0.0
  %99 = vmatpush1.msra.mxu0 0.0
  %100 = vmatprep.subr.mxu0 0.0
  %101 = vmatpush1.msra.mxu0 0.0
  %102 = vmatprep.subr.mxu0 0.0
  %103 = vmatpush1.msra.mxu0 0.0
  %104 = vmatprep.subr.mxu0 0.0
  %105 = vmatpush1.msra.mxu0 0.0
  %106 = vmatprep.subr.mxu0 0.0
  %107 = vmatpush1.msra.mxu0 0.0
  %108 = vmatprep.subr.mxu0 0.0
  %109 = vmatpush1.msra.mxu0 0.0
  %110 = vmatprep.subr.mxu0 0.0
  %111 = vmatpush1.msra.mxu0 0.0
  %112 = vmatprep.subr.mxu0 0.0
  %113 = vmatpush1.msra.mxu0 0.0
  %114 = vmatprep.subr.mxu0 0.0
  %115 = vmatpush1.msra.mxu0 0.0
  %116 = vmatprep.subr.mxu0 0.0
  %117 = vmatpush1.msra.mxu0 0.0
  %118 = vmatprep.subr.mxu0 0.0
  %119 = vmatpush1.msra.mxu0 0.0
  %120 = vmatprep.subr.mxu0 0.0
  %121 = vmatpush1.msra.mxu0 0.0
  %122 = vmatprep.subr.mxu0 0.0
  %123 = vmatpush1.msra.mxu0 0.0
  %124 = vmatprep.subr.mxu0 0.0
  %125 = vmatpush1.msra.mxu0 0.0
  %126 = vmatprep.subr.mxu0 0.0
  %127 = vmatpush1.msra.mxu0 0.0
  %128 = vmatprep.subr.mxu0 0.0
  %129 = vmatpush1.msra.mxu0 0.0
  %130 = vmatprep.subr.mxu0 0.0
  %131 = vmatpush1.msra.mxu0 0.0
  %132 = vmatprep.subr.mxu0 0.0
  %133 = vmatpush1.msra.mxu0 0.0
  %134 = vmatprep.mubr.f32.mxu0 0.0
  %135 = vmatmul.mubr.f32.gmra.mrb[0].mxu0 %v59
  %v136 = vpop.f32.mrb[0].mxu0
  %v137 = vadd.f32 %v53, %v136
  %v138 = vpop.f32.mrb[0].mxu0
  %139 = vmatprep.mubr.f32.mxu0 0.0
  %140 = vmatmul.mubr.f32.gmra.mrb[0].mxu0 %v62
  %v141 = vpop.f32.mrb[0].mxu0
  %v142 = vadd.f32 %v54, %v141
  %v143 = vpop.f32.mrb[0].mxu0
  %144 = vmatprep.mubr.f32.mxu0 0.0
  %145 = vmatmul.mubr.f32.gmra.mrb[0].mxu0 %v65
  %v146 = vpop.f32.mrb[0].mxu0
  %v147 = vadd.f32 %v55, %v146
  %v148 = vpop.f32.mrb[0].mxu0
  %149 = vmatprep.mubr.f32.mxu0 0.0
  %150 = vmatmul.mubr.f32.gmra.mrb[0].mxu0 %v68
  %v151 = vpop.f32.mrb[0].mxu0
  %v152 = vadd.f32 %v56, %v151
  %v153 = vpop.f32.mrb[0].mxu0
  %154 = vdwg.mxu0
  %v155 = vld [vmem:[%s4] sm:$0xff]
  %v156 = vld [vmem:[%s4 + $0x8] sm:$0xff]
  %v157 = vld [vmem:[%s4 + $0x10] sm:$0xff]
  %v158 = vld [vmem:[%s4 + $0x18] sm:$0xff]
  %v159 = vlaneseq
  %v160 = vshrl.u32 %v159, 7
  %v161 = vsub.s32 0, %v160
  %v162 = vrot.slane %v41, %v161
  %vm163 = vcmask 261120
  %v165 = vsel %vm163, %v137, 0
  %v168 = vsel %vm163, %v142, 0
  %v171 = vsel %vm163, %v147, 0
  %v174 = vsel %vm163, %v152, 0
  %176 = vmatprep.subr.mxu0 0.0
  %177 = vmatpush1.msra.mxu0 %v155
  %178 = vmatprep.subr.mxu0 0.0
  %179 = vmatpush1.msra.mxu0 %v156
  %180 = vmatprep.subr.mxu0 0.0
  %181 = vmatpush1.msra.mxu0 %v157
  %182 = vmatprep.subr.mxu0 0.0
  %183 = vmatpush1.msra.mxu0 %v158
  %184 = vmatprep.subr.mxu0 0.0
  %185 = vmatpush1.msra.mxu0 0.0
  %186 = vmatprep.subr.mxu0 0.0
  %187 = vmatpush1.msra.mxu0 0.0
  %188 = vmatprep.subr.mxu0 0.0
  %189 = vmatpush1.msra.mxu0 0.0
  %190 = vmatprep.subr.mxu0 0.0
  %191 = vmatpush1.msra.mxu0 0.0
  %192 = vmatprep.subr.mxu0 0.0
  %193 = vmatpush1.msra.mxu0 0.0
  %194 = vmatprep.subr.mxu0 0.0
  %195 = vmatpush1.msra.mxu0 0.0
  %196 = vmatprep.subr.mxu0 0.0
  %197 = vmatpush1.msra.mxu0 0.0
  %198 = vmatprep.subr.mxu0 0.0
  %199 = vmatpush1.msra.mxu0 0.0
  %200 = vmatprep.subr.mxu0 0.0
  %201 = vmatpush1.msra.mxu0 0.0
  %202 = vmatprep.subr.mxu0 0.0
  %203 = vmatpush1.msra.mxu0 0.0
  %204 = vmatprep.subr.mxu0 0.0
  %205 = vmatpush1.msra.mxu0 0.0
  %206 = vmatprep.subr.mxu0 0.0
  %207 = vmatpush1.msra.mxu0 0.0
  %208 = vmatprep.subr.mxu0 0.0
  %209 = vmatpush1.msra.mxu0 0.0
  %210 = vmatprep.subr.mxu0 0.0
  %211 = vmatpush1.msra.mxu0 0.0
  %212 = vmatprep.subr.mxu0 0.0
  %213 = vmatpush1.msra.mxu0 0.0
  %214 = vmatprep.subr.mxu0 0.0
  %215 = vmatpush1.msra.mxu0 0.0
  %216 = vmatprep.subr.mxu0 0.0
  %217 = vmatpush1.msra.mxu0 0.0
  %218 = vmatprep.subr.mxu0 0.0
  %219 = vmatpush1.msra.mxu0 0.0
  %220 = vmatprep.subr.mxu0 0.0
  %221 = vmatpush1.msra.mxu0 0.0
  %222 = vmatprep.subr.mxu0 0.0
  %223 = vmatpush1.msra.mxu0 0.0
  %224 = vmatprep.subr.mxu0 0.0
  %225 = vmatpush1.msra.mxu0 0.0
  %226 = vmatprep.subr.mxu0 0.0
  %227 = vmatpush1.msra.mxu0 0.0
  %228 = vmatprep.subr.mxu0 0.0
  %229 = vmatpush1.msra.mxu0 0.0
  %230 = vmatprep.subr.mxu0 0.0
  %231 = vmatpush1.msra.mxu0 0.0
  %232 = vmatprep.subr.mxu0 0.0
  %233 = vmatpush1.msra.mxu0 0.0
  %234 = vmatprep.subr.mxu0 0.0
  %235 = vmatpush1.msra.mxu0 0.0
  %236 = vmatprep.subr.mxu0 0.0
  %237 = vmatpush1.msra.mxu0 0.0
  %238 = vmatprep.subr.mxu0 0.0
  %239 = vmatpush1.msra.mxu0 0.0
  %240 = vmatprep.mubr.f32.mxu0 0.0
  %241 = vmatmul.mubr.f32.gmra.mrb[0].mxu0 %v165
  %v242 = vpop.f32.mrb[0].mxu0
  %v243 = vadd.f32 %v162, %v242
  %v244 = vpop.f32.mrb[0].mxu0
  %245 = vmatprep.mubr.f32.mxu0 0.0
  %246 = vmatmul.mubr.f32.gmra.mrb[0].mxu0 %v168
  %v247 = vpop.f32.mrb[0].mxu0
  %v248 = vadd.f32 %v162, %v247
  %v249 = vpop.f32.mrb[0].mxu0
  %250 = vmatprep.mubr.f32.mxu0 0.0
  %251 = vmatmul.mubr.f32.gmra.mrb[0].mxu0 %v171
  %v252 = vpop.f32.mrb[0].mxu0
  %v253 = vadd.f32 %v162, %v252
  %v254 = vpop.f32.mrb[0].mxu0
  %255 = vmatprep.mubr.f32.mxu0 0.0
  %256 = vmatmul.mubr.f32.gmra.mrb[0].mxu0 %v174
  %v257 = vpop.f32.mrb[0].mxu0
  %v258 = vadd.f32 %v162, %v257
  %v259 = vpop.f32.mrb[0].mxu0
  %260 = vdwg.mxu0
  %v261 = vld [vmem:[%s5] sm:$0xff]
  %v262 = vld [vmem:[%s5 + $0x8] sm:$0xff]
  %v263 = vld [vmem:[%s5 + $0x10] sm:$0xff]
  %v264 = vld [vmem:[%s5 + $0x18] sm:$0xff]
  %269 = vrot.lane.b32.xlu0 %v243, 96
  %v270 = vpop.permute.xlu0 %269
  %271 = vrot.lane.b32.xlu0 %v248, 96
  %v272 = vpop.permute.xlu0 %271
  %273 = vrot.lane.b32.xlu0 %v253, 96
  %v274 = vpop.permute.xlu0 %273
  %275 = vrot.lane.b32.xlu0 %v258, 96
  %v276 = vpop.permute.xlu0 %275
  %vm277 = vcmask 64512
  %v278 = vsel %vm277, %v243, 0
  %v280 = vsel %vm277, %v248, 0
  %v282 = vsel %vm277, %v253, 0
  %v284 = vsel %vm277, %v258, 0
  %v286 = vsel %vm277, %v270, 0
  %v288 = vsel %vm277, %v272, 0
  %v290 = vsel %vm277, %v274, 0
  %v292 = vsel %vm277, %v276, 0
  %294 = vmatprep.subr.mxu0 0.0
  %295 = vmatpush1.xpose.msra.mxu0 %v286
  %296 = vmatprep.subr.mxu0 0.0
  %297 = vmatpush1.xpose.msra.mxu0 %v288
  %298 = vmatprep.subr.mxu0 0.0
  %299 = vmatpush1.xpose.msra.mxu0 %v290
  %300 = vmatprep.subr.mxu0 0.0
  %301 = vmatpush1.xpose.msra.mxu0 %v292
  %302 = vmatprep.subr.mxu0 0.0
  %303 = vmatpush1.xpose.msra.mxu0 0.0
  %304 = vmatprep.subr.mxu0 0.0
  %305 = vmatpush1.xpose.msra.mxu0 0.0
  %306 = vmatprep.subr.mxu0 0.0
  %307 = vmatpush1.xpose.msra.mxu0 0.0
  %308 = vmatprep.subr.mxu0 0.0
  %309 = vmatpush1.xpose.msra.mxu0 0.0
  %310 = vmatprep.subr.mxu0 0.0
  %311 = vmatpush1.xpose.msra.mxu0 0.0
  %312 = vmatprep.subr.mxu0 0.0
  %313 = vmatpush1.xpose.msra.mxu0 0.0
  %314 = vmatprep.subr.mxu0 0.0
  %315 = vmatpush1.xpose.msra.mxu0 0.0
  %316 = vmatprep.subr.mxu0 0.0
  %317 = vmatpush1.xpose.msra.mxu0 0.0
  %318 = vmatprep.subr.mxu0 0.0
  %319 = vmatpush1.xpose.msra.mxu0 0.0
  %320 = vmatprep.subr.mxu0 0.0
  %321 = vmatpush1.xpose.msra.mxu0 0.0
  %322 = vmatprep.subr.mxu0 0.0
  %323 = vmatpush1.xpose.msra.mxu0 0.0
  %324 = vmatprep.subr.mxu0 0.0
  %325 = vmatpush1.xpose.msra.mxu0 0.0
  %326 = vmatprep.subr.mxu0 0.0
  %327 = vmatpush1.xpose.msra.mxu0 0.0
  %328 = vmatprep.subr.mxu0 0.0
  %329 = vmatpush1.xpose.msra.mxu0 0.0
  %330 = vmatprep.subr.mxu0 0.0
  %331 = vmatpush1.xpose.msra.mxu0 0.0
  %332 = vmatprep.subr.mxu0 0.0
  %333 = vmatpush1.xpose.msra.mxu0 0.0
  %334 = vmatprep.subr.mxu0 0.0
  %335 = vmatpush1.xpose.msra.mxu0 0.0
  %336 = vmatprep.subr.mxu0 0.0
  %337 = vmatpush1.xpose.msra.mxu0 0.0
  %338 = vmatprep.subr.mxu0 0.0
  %339 = vmatpush1.xpose.msra.mxu0 0.0
  %340 = vmatprep.subr.mxu0 0.0
  %341 = vmatpush1.xpose.msra.mxu0 0.0
  %342 = vmatprep.subr.mxu0 0.0
  %343 = vmatpush1.xpose.msra.mxu0 0.0
  %344 = vmatprep.subr.mxu0 0.0
  %345 = vmatpush1.xpose.msra.mxu0 0.0
  %346 = vmatprep.subr.mxu0 0.0
  %347 = vmatpush1.xpose.msra.mxu0 0.0
  %348 = vmatprep.subr.mxu0 0.0
  %349 = vmatpush1.xpose.msra.mxu0 0.0
  %350 = vmatprep.subr.mxu0 0.0
  %351 = vmatpush1.xpose.msra.mxu0 0.0
  %352 = vmatprep.subr.mxu0 0.0
  %353 = vmatpush1.xpose.msra.mxu0 0.0
  %354 = vmatprep.subr.mxu0 0.0
  %355 = vmatpush1.xpose.msra.mxu0 0.0
  %356 = vmatprep.subr.mxu0 0.0
  %357 = vmatpush1.xpose.msra.mxu0 0.0
  %358 = vmatprep.mubr.f32.mxu0 0.0
  %359 = vmatmul.mubr.f32.gmra.mrb[0].mxu0 %v278
  %v360 = vpop.f32.mrb[0].mxu0
  %v361 = vadd.f32 0.0, %v360
  %v362 = vpop.f32.mrb[0].mxu0
  %363 = vmatprep.mubr.f32.mxu0 0.0
  %364 = vmatmul.mubr.f32.gmra.mrb[0].mxu0 %v280
  %v365 = vpop.f32.mrb[0].mxu0
  %v366 = vadd.f32 0.0, %v365
  %v367 = vpop.f32.mrb[0].mxu0
  %368 = vmatprep.mubr.f32.mxu0 0.0
  %369 = vmatmul.mubr.f32.gmra.mrb[0].mxu0 %v282
  %v370 = vpop.f32.mrb[0].mxu0
  %v371 = vadd.f32 0.0, %v370
  %v372 = vpop.f32.mrb[0].mxu0
  %373 = vmatprep.mubr.f32.mxu0 0.0
  %374 = vmatmul.mubr.f32.gmra.mrb[0].mxu0 %v284
  %v375 = vpop.f32.mrb[0].mxu0
  %v376 = vadd.f32 0.0, %v375
  %v377 = vpop.f32.mrb[0].mxu0
  %378 = vdwg.mxu0
  %v379 = vmul.f32 %v361, 0.35355338
  %v380 = vmul.f32 %v366, 0.35355338
  %v381 = vmul.f32 %v371, 0.35355338
  %v382 = vmul.f32 %v376, 0.35355338
  %v383 = vadd.f32 %v379, %v43
  %v384 = vadd.f32 %v380, %v44
  %v385 = vadd.f32 %v381, %v45
  %v386 = vadd.f32 %v382, %v46
  %v387 = vsel %vm163, %v383, -inf
  %388 = vmax.xlane.f32.xlu0 %v387
  %v389 = vpop.xlane.xlu0 %388
  %v390 = vsel %vm163, %v384, -inf
  %391 = vmax.xlane.f32.xlu0 %v390
  %v392 = vpop.xlane.xlu0 %391
  %v393 = vsel %vm163, %v385, -inf
  %394 = vmax.xlane.f32.xlu0 %v393
  %v395 = vpop.xlane.xlu0 %394
  %v396 = vsel %vm163, %v386, -inf
  %397 = vmax.xlane.f32.xlu0 %v396
  %v398 = vpop.xlane.xlu0 %397
  %v399 = vsub.f32 %v383, %v389
  %v400 = vsub.f32 %v384, %v392
  %v401 = vsub.f32 %v385, %v395
  %v402 = vsub.f32 %v386, %v398
  %v403 = vmul.f32 %v399, 1.442695
  %v404 = vpow.pop %v403
  %v405 = vmul.f32 %v400, 1.442695
  %v406 = vpow.pop %v405
  %v407 = vmul.f32 %v401, 1.442695
  %v408 = vpow.pop %v407
  %v409 = vmul.f32 %v402, 1.442695
  %v410 = vpow.pop %v409
  %v411 = vsel %vm163, %v404, 0.0
  %412 = vadd.xlane.f32.xlu0 %v411
  %v413 = vpop.xlane.xlu0 %412
  %v414 = vsel %vm163, %v406, 0.0
  %415 = vadd.xlane.f32.xlu0 %v414
  %v416 = vpop.xlane.xlu0 %415
  %v417 = vsel %vm163, %v408, 0.0
  %418 = vadd.xlane.f32.xlu0 %v417
  %v419 = vpop.xlane.xlu0 %418
  %v420 = vsel %vm163, %v410, 0.0
  %421 = vadd.xlane.f32.xlu0 %v420
  %v422 = vpop.xlane.xlu0 %421
  %v423 = vrcp.pop %v413
  %v424 = vrcp.pop %v416
  %v425 = vrcp.pop %v419
  %v426 = vrcp.pop %v422
  %v427 = vmul.f32 %v404, %v423
  %v428 = vmul.f32 %v406, %v424
  %v429 = vmul.f32 %v408, %v425
  %v430 = vmul.f32 %v410, %v426
  %431 = vrot.lane.b32.xlu0 %v243, 64
  %v432 = vpop.permute.xlu0 %431
  %433 = vrot.lane.b32.xlu0 %v248, 64
  %v434 = vpop.permute.xlu0 %433
  %435 = vrot.lane.b32.xlu0 %v253, 64
  %v436 = vpop.permute.xlu0 %435
  %437 = vrot.lane.b32.xlu0 %v258, 64
  %v438 = vpop.permute.xlu0 %437
  %v444 = vsel %vm163, %v427, 0
  %v447 = vsel %vm163, %v428, 0
  %v450 = vsel %vm163, %v429, 0
  %v453 = vsel %vm163, %v430, 0
  %455 = vmatprep.subr.mxu0 0.0
  %456 = vmatpush1.msra.mxu0 %v432
  %457 = vmatprep.subr.mxu0 0.0
  %458 = vmatpush1.msra.mxu0 %v434
  %459 = vmatprep.subr.mxu0 0.0
  %460 = vmatpush1.msra.mxu0 %v436
  %461 = vmatprep.subr.mxu0 0.0
  %462 = vmatpush1.msra.mxu0 %v438
  %463 = vmatprep.subr.mxu0 0.0
  %464 = vmatpush1.msra.mxu0 0.0
  %465 = vmatprep.subr.mxu0 0.0
  %466 = vmatpush1.msra.mxu0 0.0
  %467 = vmatprep.subr.mxu0 0.0
  %468 = vmatpush1.msra.mxu0 0.0
  %469 = vmatprep.subr.mxu0 0.0
  %470 = vmatpush1.msra.mxu0 0.0
  %471 = vmatprep.subr.mxu0 0.0
  %472 = vmatpush1.msra.mxu0 0.0
  %473 = vmatprep.subr.mxu0 0.0
  %474 = vmatpush1.msra.mxu0 0.0
  %475 = vmatprep.subr.mxu0 0.0
  %476 = vmatpush1.msra.mxu0 0.0
  %477 = vmatprep.subr.mxu0 0.0
  %478 = vmatpush1.msra.mxu0 0.0
  %479 = vmatprep.subr.mxu0 0.0
  %480 = vmatpush1.msra.mxu0 0.0
  %481 = vmatprep.subr.mxu0 0.0
  %482 = vmatpush1.msra.mxu0 0.0
  %483 = vmatprep.subr.mxu0 0.0
  %484 = vmatpush1.msra.mxu0 0.0
  %485 = vmatprep.subr.mxu0 0.0
  %486 = vmatpush1.msra.mxu0 0.0
  %487 = vmatprep.subr.mxu0 0.0
  %488 = vmatpush1.msra.mxu0 0.0
  %489 = vmatprep.subr.mxu0 0.0
  %490 = vmatpush1.msra.mxu0 0.0
  %491 = vmatprep.subr.mxu0 0.0
  %492 = vmatpush1.msra.mxu0 0.0
  %493 = vmatprep.subr.mxu0 0.0
  %494 = vmatpush1.msra.mxu0 0.0
  %495 = vmatprep.subr.mxu0 0.0
  %496 = vmatpush1.msra.mxu0 0.0
  %497 = vmatprep.subr.mxu0 0.0
  %498 = vmatpush1.msra.mxu0 0.0
  %499 = vmatprep.subr.mxu0 0.0
  %500 = vmatpush1.msra.mxu0 0.0
  %501 = vmatprep.subr.mxu0 0.0
  %502 = vmatpush1.msra.mxu0 0.0
  %503 = vmatprep.subr.mxu0 0.0
  %504 = vmatpush1.msra.mxu0 0.0
  %505 = vmatprep.subr.mxu0 0.0
  %506 = vmatpush1.msra.mxu0 0.0
  %507 = vmatprep.subr.mxu0 0.0
  %508 = vmatpush1.msra.mxu0 0.0
  %509 = vmatprep.subr.mxu0 0.0
  %510 = vmatpush1.msra.mxu0 0.0
  %511 = vmatprep.subr.mxu0 0.0
  %512 = vmatpush1.msra.mxu0 0.0
  %513 = vmatprep.subr.mxu0 0.0
  %514 = vmatpush1.msra.mxu0 0.0
  %515 = vmatprep.subr.mxu0 0.0
  %516 = vmatpush1.msra.mxu0 0.0
  %517 = vmatprep.subr.mxu0 0.0
  %518 = vmatpush1.msra.mxu0 0.0
  %519 = vmatprep.mubr.f32.mxu0 0.0
  %520 = vmatmul.mubr.f32.gmra.mrb[0].mxu0 %v444
  %v521 = vpop.f32.mrb[0].mxu0
  %v522 = vadd.f32 0.0, %v521
  %v523 = vpop.f32.mrb[0].mxu0
  %524 = vmatprep.mubr.f32.mxu0 0.0
  %525 = vmatmul.mubr.f32.gmra.mrb[0].mxu0 %v447
  %v526 = vpop.f32.mrb[0].mxu0
  %v527 = vadd.f32 0.0, %v526
  %v528 = vpop.f32.mrb[0].mxu0
  %529 = vmatprep.mubr.f32.mxu0 0.0
  %530 = vmatmul.mubr.f32.gmra.mrb[0].mxu0 %v450
  %v531 = vpop.f32.mrb[0].mxu0
  %v532 = vadd.f32 0.0, %v531
  %v533 = vpop.f32.mrb[0].mxu0
  %534 = vmatprep.mubr.f32.mxu0 0.0
  %535 = vmatmul.mubr.f32.gmra.mrb[0].mxu0 %v453
  %v536 = vpop.f32.mrb[0].mxu0
  %v537 = vadd.f32 0.0, %v536
  %v538 = vpop.f32.mrb[0].mxu0
  %539 = vdwg.mxu0
  %540 = vrot.lane.b32.xlu0 %v243, 120
  %v541 = vpop.permute.xlu0 %540
  %542 = vrot.lane.b32.xlu0 %v248, 120
  %v543 = vpop.permute.xlu0 %542
  %544 = vrot.lane.b32.xlu0 %v253, 120
  %v545 = vpop.permute.xlu0 %544
  %546 = vrot.lane.b32.xlu0 %v258, 120
  %v547 = vpop.permute.xlu0 %546
  %548 = vrot.lane.b32.xlu0 %v243, 88
  %v549 = vpop.permute.xlu0 %548
  %550 = vrot.lane.b32.xlu0 %v248, 88
  %v551 = vpop.permute.xlu0 %550
  %552 = vrot.lane.b32.xlu0 %v253, 88
  %v553 = vpop.permute.xlu0 %552
  %554 = vrot.lane.b32.xlu0 %v258, 88
  %v555 = vpop.permute.xlu0 %554
  %v556 = vsel %vm277, %v541, 0
  %v558 = vsel %vm277, %v543, 0
  %v560 = vsel %vm277, %v545, 0
  %v562 = vsel %vm277, %v547, 0
  %v564 = vsel %vm277, %v549, 0
  %v566 = vsel %vm277, %v551, 0
  %v568 = vsel %vm277, %v553, 0
  %v570 = vsel %vm277, %v555, 0
  %572 = vmatprep.subr.mxu0 0.0
  %573 = vmatpush1.xpose.msra.mxu0 %v564
  %574 = vmatprep.subr.mxu0 0.0
  %575 = vmatpush1.xpose.msra.mxu0 %v566
  %576 = vmatprep.subr.mxu0 0.0
  %577 = vmatpush1.xpose.msra.mxu0 %v568
  %578 = vmatprep.subr.mxu0 0.0
  %579 = vmatpush1.xpose.msra.mxu0 %v570
  %580 = vmatprep.subr.mxu0 0.0
  %581 = vmatpush1.xpose.msra.mxu0 0.0
  %582 = vmatprep.subr.mxu0 0.0
  %583 = vmatpush1.xpose.msra.mxu0 0.0
  %584 = vmatprep.subr.mxu0 0.0
  %585 = vmatpush1.xpose.msra.mxu0 0.0
  %586 = vmatprep.subr.mxu0 0.0
  %587 = vmatpush1.xpose.msra.mxu0 0.0
  %588 = vmatprep.subr.mxu0 0.0
  %589 = vmatpush1.xpose.msra.mxu0 0.0
  %590 = vmatprep.subr.mxu0 0.0
  %591 = vmatpush1.xpose.msra.mxu0 0.0
  %592 = vmatprep.subr.mxu0 0.0
  %593 = vmatpush1.xpose.msra.mxu0 0.0
  %594 = vmatprep.subr.mxu0 0.0
  %595 = vmatpush1.xpose.msra.mxu0 0.0
  %596 = vmatprep.subr.mxu0 0.0
  %597 = vmatpush1.xpose.msra.mxu0 0.0
  %598 = vmatprep.subr.mxu0 0.0
  %599 = vmatpush1.xpose.msra.mxu0 0.0
  %600 = vmatprep.subr.mxu0 0.0
  %601 = vmatpush1.xpose.msra.mxu0 0.0
  %602 = vmatprep.subr.mxu0 0.0
  %603 = vmatpush1.xpose.msra.mxu0 0.0
  %604 = vmatprep.subr.mxu0 0.0
  %605 = vmatpush1.xpose.msra.mxu0 0.0
  %606 = vmatprep.subr.mxu0 0.0
  %607 = vmatpush1.xpose.msra.mxu0 0.0
  %608 = vmatprep.subr.mxu0 0.0
  %609 = vmatpush1.xpose.msra.mxu0 0.0
  %610 = vmatprep.subr.mxu0 0.0
  %611 = vmatpush1.xpose.msra.mxu0 0.0
  %612 = vmatprep.subr.mxu0 0.0
  %613 = vmatpush1.xpose.msra.mxu0 0.0
  %614 = vmatprep.subr.mxu0 0.0
  %615 = vmatpush1.xpose.msra.mxu0 0.0
  %616 = vmatprep.subr.mxu0 0.0
  %617 = vmatpush1.xpose.msra.mxu0 0.0
  %618 = vmatprep.subr.mxu0 0.0
  %619 = vmatpush1.xpose.msra.mxu0 0.0
  %620 = vmatprep.subr.mxu0 0.0
  %621 = vmatpush1.xpose.msra.mxu0 0.0
  %622 = vmatprep.subr.mxu0 0.0
  %623 = vmatpush1.xpose.msra.mxu0 0.0
  %624 = vmatprep.subr.mxu0 0.0
  %625 = vmatpush1.xpose.msra.mxu0 0.0
  %626 = vmatprep.subr.mxu0 0.0
  %627 = vmatpush1.xpose.msra.mxu0 0.0
  %628 = vmatprep.subr.mxu0 0.0
  %629 = vmatpush1.xpose.msra.mxu0 0.0
  %630 = vmatprep.subr.mxu0 0.0
  %631 = vmatpush1.xpose.msra.mxu0 0.0
  %632 = vmatprep.subr.mxu0 0.0
  %633 = vmatpush1.xpose.msra.mxu0 0.0
  %634 = vmatprep.subr.mxu0 0.0
  %635 = vmatpush1.xpose.msra.mxu0 0.0
  %636 = vmatprep.mubr.f32.mxu0 0.0
  %637 = vmatmul.mubr.f32.gmra.mrb[0].mxu0 %v556
  %v638 = vpop.f32.mrb[0].mxu0
  %v639 = vadd.f32 0.0, %v638
  %v640 = vpop.f32.mrb[0].mxu0
  %641 = vmatprep.mubr.f32.mxu0 0.0
  %642 = vmatmul.mubr.f32.gmra.mrb[0].mxu0 %v558
  %v643 = vpop.f32.mrb[0].mxu0
  %v644 = vadd.f32 0.0, %v643
  %v645 = vpop.f32.mrb[0].mxu0
  %646 = vmatprep.mubr.f32.mxu0 0.0
  %647 = vmatmul.mubr.f32.gmra.mrb[0].mxu0 %v560
  %v648 = vpop.f32.mrb[0].mxu0
  %v649 = vadd.f32 0.0, %v648
  %v650 = vpop.f32.mrb[0].mxu0
  %651 = vmatprep.mubr.f32.mxu0 0.0
  %652 = vmatmul.mubr.f32.gmra.mrb[0].mxu0 %v562
  %v653 = vpop.f32.mrb[0].mxu0
  %v654 = vadd.f32 0.0, %v653
  %v655 = vpop.f32.mrb[0].mxu0
  %656 = vdwg.mxu0
  %v657 = vmul.f32 %v639, 0.35355338
  %v658 = vmul.f32 %v644, 0.35355338
  %v659 = vmul.f32 %v649, 0.35355338
  %v660 = vmul.f32 %v654, 0.35355338
  %v661 = vadd.f32 %v657, %v43
  %v662 = vadd.f32 %v658, %v44
  %v663 = vadd.f32 %v659, %v45
  %v664 = vadd.f32 %v660, %v46
  %v665 = vsel %vm163, %v661, -inf
  %666 = vmax.xlane.f32.xlu0 %v665
  %v667 = vpop.xlane.xlu0 %666
  %v668 = vsel %vm163, %v662, -inf
  %669 = vmax.xlane.f32.xlu0 %v668
  %v670 = vpop.xlane.xlu0 %669
  %v671 = vsel %vm163, %v663, -inf
  %672 = vmax.xlane.f32.xlu0 %v671
  %v673 = vpop.xlane.xlu0 %672
  %v674 = vsel %vm163, %v664, -inf
  %675 = vmax.xlane.f32.xlu0 %v674
  %v676 = vpop.xlane.xlu0 %675
  %v677 = vsub.f32 %v661, %v667
  %v678 = vsub.f32 %v662, %v670
  %v679 = vsub.f32 %v663, %v673
  %v680 = vsub.f32 %v664, %v676
  %v681 = vmul.f32 %v677, 1.442695
  %v682 = vpow.pop %v681
  %v683 = vmul.f32 %v678, 1.442695
  %v684 = vpow.pop %v683
  %v685 = vmul.f32 %v679, 1.442695
  %v686 = vpow.pop %v685
  %v687 = vmul.f32 %v680, 1.442695
  %v688 = vpow.pop %v687
  %v689 = vsel %vm163, %v682, 0.0
  %690 = vadd.xlane.f32.xlu0 %v689
  %v691 = vpop.xlane.xlu0 %690
  %v692 = vsel %vm163, %v684, 0.0
  %693 = vadd.xlane.f32.xlu0 %v692
  %v694 = vpop.xlane.xlu0 %693
  %v695 = vsel %vm163, %v686, 0.0
  %696 = vadd.xlane.f32.xlu0 %v695
  %v697 = vpop.xlane.xlu0 %696
  %v698 = vsel %vm163, %v688, 0.0
  %699 = vadd.xlane.f32.xlu0 %v698
  %v700 = vpop.xlane.xlu0 %699
  %v701 = vrcp.pop %v691
  %v702 = vrcp.pop %v694
  %v703 = vrcp.pop %v697
  %v704 = vrcp.pop %v700
  %v705 = vmul.f32 %v682, %v701
  %v706 = vmul.f32 %v684, %v702
  %v707 = vmul.f32 %v686, %v703
  %v708 = vmul.f32 %v688, %v704
  %709 = vrot.lane.b32.xlu0 %v243, 56
  %v710 = vpop.permute.xlu0 %709
  %711 = vrot.lane.b32.xlu0 %v248, 56
  %v712 = vpop.permute.xlu0 %711
  %713 = vrot.lane.b32.xlu0 %v253, 56
  %v714 = vpop.permute.xlu0 %713
  %715 = vrot.lane.b32.xlu0 %v258, 56
  %v716 = vpop.permute.xlu0 %715
  %v722 = vsel %vm163, %v705, 0
  %v725 = vsel %vm163, %v706, 0
  %v728 = vsel %vm163, %v707, 0
  %v731 = vsel %vm163, %v708, 0
  %733 = vmatprep.subr.mxu0 0.0
  %734 = vmatpush1.msra.mxu0 %v710
  %735 = vmatprep.subr.mxu0 0.0
  %736 = vmatpush1.msra.mxu0 %v712
  %737 = vmatprep.subr.mxu0 0.0
  %738 = vmatpush1.msra.mxu0 %v714
  %739 = vmatprep.subr.mxu0 0.0
  %740 = vmatpush1.msra.mxu0 %v716
  %741 = vmatprep.subr.mxu0 0.0
  %742 = vmatpush1.msra.mxu0 0.0
  %743 = vmatprep.subr.mxu0 0.0
  %744 = vmatpush1.msra.mxu0 0.0
  %745 = vmatprep.subr.mxu0 0.0
  %746 = vmatpush1.msra.mxu0 0.0
  %747 = vmatprep.subr.mxu0 0.0
  %748 = vmatpush1.msra.mxu0 0.0
  %749 = vmatprep.subr.mxu0 0.0
  %750 = vmatpush1.msra.mxu0 0.0
  %751 = vmatprep.subr.mxu0 0.0
  %752 = vmatpush1.msra.mxu0 0.0
  %753 = vmatprep.subr.mxu0 0.0
  %754 = vmatpush1.msra.mxu0 0.0
  %755 = vmatprep.subr.mxu0 0.0
  %756 = vmatpush1.msra.mxu0 0.0
  %757 = vmatprep.subr.mxu0 0.0
  %758 = vmatpush1.msra.mxu0 0.0
  %759 = vmatprep.subr.mxu0 0.0
  %760 = vmatpush1.msra.mxu0 0.0
  %761 = vmatprep.subr.mxu0 0.0
  %762 = vmatpush1.msra.mxu0 0.0
  %763 = vmatprep.subr.mxu0 0.0
  %764 = vmatpush1.msra.mxu0 0.0
  %765 = vmatprep.subr.mxu0 0.0
  %766 = vmatpush1.msra.mxu0 0.0
  %767 = vmatprep.subr.mxu0 0.0
  %768 = vmatpush1.msra.mxu0 0.0
  %769 = vmatprep.subr.mxu0 0.0
  %770 = vmatpush1.msra.mxu0 0.0
  %771 = vmatprep.subr.mxu0 0.0
  %772 = vmatpush1.msra.mxu0 0.0
  %773 = vmatprep.subr.mxu0 0.0
  %774 = vmatpush1.msra.mxu0 0.0
  %775 = vmatprep.subr.mxu0 0.0
  %776 = vmatpush1.msra.mxu0 0.0
  %777 = vmatprep.subr.mxu0 0.0
  %778 = vmatpush1.msra.mxu0 0.0
  %779 = vmatprep.subr.mxu0 0.0
  %780 = vmatpush1.msra.mxu0 0.0
  %781 = vmatprep.subr.mxu0 0.0
  %782 = vmatpush1.msra.mxu0 0.0
  %783 = vmatprep.subr.mxu0 0.0
  %784 = vmatpush1.msra.mxu0 0.0
  %785 = vmatprep.subr.mxu0 0.0
  %786 = vmatpush1.msra.mxu0 0.0
  %787 = vmatprep.subr.mxu0 0.0
  %788 = vmatpush1.msra.mxu0 0.0
  %789 = vmatprep.subr.mxu0 0.0
  %790 = vmatpush1.msra.mxu0 0.0
  %791 = vmatprep.subr.mxu0 0.0
  %792 = vmatpush1.msra.mxu0 0.0
  %793 = vmatprep.subr.mxu0 0.0
  %794 = vmatpush1.msra.mxu0 0.0
  %795 = vmatprep.subr.mxu0 0.0
  %796 = vmatpush1.msra.mxu0 0.0
  %797 = vmatprep.mubr.f32.mxu0 0.0
  %798 = vmatmul.mubr.f32.gmra.mrb[0].mxu0 %v722
  %v799 = vpop.f32.mrb[0].mxu0
  %v800 = vadd.f32 0.0, %v799
  %v801 = vpop.f32.mrb[0].mxu0
  %802 = vmatprep.mubr.f32.mxu0 0.0
  %803 = vmatmul.mubr.f32.gmra.mrb[0].mxu0 %v725
  %v804 = vpop.f32.mrb[0].mxu0
  %v805 = vadd.f32 0.0, %v804
  %v806 = vpop.f32.mrb[0].mxu0
  %807 = vmatprep.mubr.f32.mxu0 0.0
  %808 = vmatmul.mubr.f32.gmra.mrb[0].mxu0 %v728
  %v809 = vpop.f32.mrb[0].mxu0
  %v810 = vadd.f32 0.0, %v809
  %v811 = vpop.f32.mrb[0].mxu0
  %812 = vmatprep.mubr.f32.mxu0 0.0
  %813 = vmatmul.mubr.f32.gmra.mrb[0].mxu0 %v731
  %v814 = vpop.f32.mrb[0].mxu0
  %v815 = vadd.f32 0.0, %v814
  %v816 = vpop.f32.mrb[0].mxu0
  %817 = vdwg.mxu0
  %v819 = vsel %vm277, %v800, 0
  %v822 = vsel %vm277, %v805, 0
  %v825 = vsel %vm277, %v810, 0
  %v828 = vsel %vm277, %v815, 0
  %830 = vmatprep.subr.mxu0 0.0
  %831 = vmatpush1.msra.mxu0 %v262
  %832 = vmatprep.subr.mxu0 0.0
  %833 = vmatpush1.msra.mxu0 0.0
  %834 = vmatprep.subr.mxu0 0.0
  %835 = vmatpush1.msra.mxu0 0.0
  %836 = vmatprep.subr.mxu0 0.0
  %837 = vmatpush1.msra.mxu0 0.0
  %838 = vmatprep.subr.mxu0 0.0
  %839 = vmatpush1.msra.mxu0 0.0
  %840 = vmatprep.subr.mxu0 0.0
  %841 = vmatpush1.msra.mxu0 0.0
  %842 = vmatprep.subr.mxu0 0.0
  %843 = vmatpush1.msra.mxu0 0.0
  %844 = vmatprep.subr.mxu0 0.0
  %845 = vmatpush1.msra.mxu0 0.0
  %846 = vmatprep.subr.mxu0 0.0
  %847 = vmatpush1.msra.mxu0 0.0
  %848 = vmatprep.subr.mxu0 0.0
  %849 = vmatpush1.msra.mxu0 0.0
  %850 = vmatprep.subr.mxu0 0.0
  %851 = vmatpush1.msra.mxu0 0.0
  %852 = vmatprep.subr.mxu0 0.0
  %853 = vmatpush1.msra.mxu0 0.0
  %854 = vmatprep.subr.mxu0 0.0
  %855 = vmatpush1.msra.mxu0 0.0
  %856 = vmatprep.subr.mxu0 0.0
  %857 = vmatpush1.msra.mxu0 0.0
  %858 = vmatprep.subr.mxu0 0.0
  %859 = vmatpush1.msra.mxu0 0.0
  %860 = vmatprep.subr.mxu0 0.0
  %861 = vmatpush1.msra.mxu0 0.0
  %862 = vmatprep.subr.mxu0 0.0
  %863 = vmatpush1.msra.mxu0 0.0
  %864 = vmatprep.subr.mxu0 0.0
  %865 = vmatpush1.msra.mxu0 0.0
  %866 = vmatprep.subr.mxu0 0.0
  %867 = vmatpush1.msra.mxu0 0.0
  %868 = vmatprep.subr.mxu0 0.0
  %869 = vmatpush1.msra.mxu0 0.0
  %870 = vmatprep.subr.mxu0 0.0
  %871 = vmatpush1.msra.mxu0 0.0
  %872 = vmatprep.subr.mxu0 0.0
  %873 = vmatpush1.msra.mxu0 0.0
  %874 = vmatprep.subr.mxu0 0.0
  %875 = vmatpush1.msra.mxu0 0.0
  %876 = vmatprep.subr.mxu0 0.0
  %877 = vmatpush1.msra.mxu0 0.0
  %878 = vmatprep.subr.mxu0 0.0
  %879 = vmatpush1.msra.mxu0 0.0
  %880 = vmatprep.subr.mxu0 0.0
  %881 = vmatpush1.msra.mxu0 0.0
  %882 = vmatprep.subr.mxu0 0.0
  %883 = vmatpush1.msra.mxu0 0.0
  %884 = vmatprep.subr.mxu0 0.0
  %885 = vmatpush1.msra.mxu0 0.0
  %886 = vmatprep.subr.mxu0 0.0
  %887 = vmatpush1.msra.mxu0 0.0
  %888 = vmatprep.subr.mxu0 0.0
  %889 = vmatpush1.msra.mxu0 0.0
  %890 = vmatprep.subr.mxu0 0.0
  %891 = vmatpush1.msra.mxu0 0.0
  %892 = vmatprep.subr.mxu0 0.0
  %893 = vmatpush1.msra.mxu0 0.0
  %894 = vmatprep.mubr.f32.mxu0 0.0
  %895 = vmatmul.mubr.f32.gmra.mrb[0].mxu0 %v819
  %v896 = vpop.f32.mrb[0].mxu0
  %v897 = vadd.f32 0.0, %v896
  %v898 = vpop.f32.mrb[0].mxu0
  %899 = vmatprep.mubr.f32.mxu0 0.0
  %900 = vmatmul.mubr.f32.gmra.mrb[0].mxu0 %v822
  %v901 = vpop.f32.mrb[0].mxu0
  %v902 = vadd.f32 0.0, %v901
  %v903 = vpop.f32.mrb[0].mxu0
  %904 = vmatprep.mubr.f32.mxu0 0.0
  %905 = vmatmul.mubr.f32.gmra.mrb[0].mxu0 %v825
  %v906 = vpop.f32.mrb[0].mxu0
  %v907 = vadd.f32 0.0, %v906
  %v908 = vpop.f32.mrb[0].mxu0
  %909 = vmatprep.mubr.f32.mxu0 0.0
  %910 = vmatmul.mubr.f32.gmra.mrb[0].mxu0 %v828
  %v911 = vpop.f32.mrb[0].mxu0
  %v912 = vadd.f32 0.0, %v911
  %v913 = vpop.f32.mrb[0].mxu0
  %914 = vdwg.mxu0
  %v916 = vsel %vm277, %v522, 0
  %v919 = vsel %vm277, %v527, 0
  %v922 = vsel %vm277, %v532, 0
  %v925 = vsel %vm277, %v537, 0
  %927 = vmatprep.subr.mxu0 0.0
  %928 = vmatpush1.msra.mxu0 %v261
  %929 = vmatprep.subr.mxu0 0.0
  %930 = vmatpush1.msra.mxu0 0.0
  %931 = vmatprep.subr.mxu0 0.0
  %932 = vmatpush1.msra.mxu0 0.0
  %933 = vmatprep.subr.mxu0 0.0
  %934 = vmatpush1.msra.mxu0 0.0
  %935 = vmatprep.subr.mxu0 0.0
  %936 = vmatpush1.msra.mxu0 0.0
  %937 = vmatprep.subr.mxu0 0.0
  %938 = vmatpush1.msra.mxu0 0.0
  %939 = vmatprep.subr.mxu0 0.0
  %940 = vmatpush1.msra.mxu0 0.0
  %941 = vmatprep.subr.mxu0 0.0
  %942 = vmatpush1.msra.mxu0 0.0
  %943 = vmatprep.subr.mxu0 0.0
  %944 = vmatpush1.msra.mxu0 0.0
  %945 = vmatprep.subr.mxu0 0.0
  %946 = vmatpush1.msra.mxu0 0.0
  %947 = vmatprep.subr.mxu0 0.0
  %948 = vmatpush1.msra.mxu0 0.0
  %949 = vmatprep.subr.mxu0 0.0
  %950 = vmatpush1.msra.mxu0 0.0
  %951 = vmatprep.subr.mxu0 0.0
  %952 = vmatpush1.msra.mxu0 0.0
  %953 = vmatprep.subr.mxu0 0.0
  %954 = vmatpush1.msra.mxu0 0.0
  %955 = vmatprep.subr.mxu0 0.0
  %956 = vmatpush1.msra.mxu0 0.0
  %957 = vmatprep.subr.mxu0 0.0
  %958 = vmatpush1.msra.mxu0 0.0
  %959 = vmatprep.subr.mxu0 0.0
  %960 = vmatpush1.msra.mxu0 0.0
  %961 = vmatprep.subr.mxu0 0.0
  %962 = vmatpush1.msra.mxu0 0.0
  %963 = vmatprep.subr.mxu0 0.0
  %964 = vmatpush1.msra.mxu0 0.0
  %965 = vmatprep.subr.mxu0 0.0
  %966 = vmatpush1.msra.mxu0 0.0
  %967 = vmatprep.subr.mxu0 0.0
  %968 = vmatpush1.msra.mxu0 0.0
  %969 = vmatprep.subr.mxu0 0.0
  %970 = vmatpush1.msra.mxu0 0.0
  %971 = vmatprep.subr.mxu0 0.0
  %972 = vmatpush1.msra.mxu0 0.0
  %973 = vmatprep.subr.mxu0 0.0
  %974 = vmatpush1.msra.mxu0 0.0
  %975 = vmatprep.subr.mxu0 0.0
  %976 = vmatpush1.msra.mxu0 0.0
  %977 = vmatprep.subr.mxu0 0.0
  %978 = vmatpush1.msra.mxu0 0.0
  %979 = vmatprep.subr.mxu0 0.0
  %980 = vmatpush1.msra.mxu0 0.0
  %981 = vmatprep.subr.mxu0 0.0
  %982 = vmatpush1.msra.mxu0 0.0
  %983 = vmatprep.subr.mxu0 0.0
  %984 = vmatpush1.msra.mxu0 0.0
  %985 = vmatprep.subr.mxu0 0.0
  %986 = vmatpush1.msra.mxu0 0.0
  %987 = vmatprep.subr.mxu0 0.0
  %988 = vmatpush1.msra.mxu0 0.0
  %989 = vmatprep.subr.mxu0 0.0
  %990 = vmatpush1.msra.mxu0 0.0
  %991 = vmatprep.mubr.f32.mxu0 0.0
  %992 = vmatmul.mubr.f32.gmra.mrb[0].mxu0 %v916
  %v993 = vpop.f32.mrb[0].mxu0
  %v994 = vadd.f32 %v897, %v993
  %v995 = vpop.f32.mrb[0].mxu0
  %996 = vmatprep.mubr.f32.mxu0 0.0
  %997 = vmatmul.mubr.f32.gmra.mrb[0].mxu0 %v919
  %v998 = vpop.f32.mrb[0].mxu0
  %v999 = vadd.f32 %v902, %v998
  %v1000 = vpop.f32.mrb[0].mxu0
  %1001 = vmatprep.mubr.f32.mxu0 0.0
  %1002 = vmatmul.mubr.f32.gmra.mrb[0].mxu0 %v922
  %v1003 = vpop.f32.mrb[0].mxu0
  %v1004 = vadd.f32 %v907, %v1003
  %v1005 = vpop.f32.mrb[0].mxu0
  %1006 = vmatprep.mubr.f32.mxu0 0.0
  %1007 = vmatmul.mubr.f32.gmra.mrb[0].mxu0 %v925
  %v1008 = vpop.f32.mrb[0].mxu0
  %v1009 = vadd.f32 %v912, %v1008
  %v1010 = vpop.f32.mrb[0].mxu0
  %1011 = vdwg.mxu0
  %1012 = vrot.lane.b32.xlu0 %v243, 112
  %v1013 = vpop.permute.xlu0 %1012
  %1014 = vrot.lane.b32.xlu0 %v248, 112
  %v1015 = vpop.permute.xlu0 %1014
  %1016 = vrot.lane.b32.xlu0 %v253, 112
  %v1017 = vpop.permute.xlu0 %1016
  %1018 = vrot.lane.b32.xlu0 %v258, 112
  %v1019 = vpop.permute.xlu0 %1018
  %1020 = vrot.lane.b32.xlu0 %v243, 80
  %v1021 = vpop.permute.xlu0 %1020
  %1022 = vrot.lane.b32.xlu0 %v248, 80
  %v1023 = vpop.permute.xlu0 %1022
  %1024 = vrot.lane.b32.xlu0 %v253, 80
  %v1025 = vpop.permute.xlu0 %1024
  %1026 = vrot.lane.b32.xlu0 %v258, 80
  %v1027 = vpop.permute.xlu0 %1026
  %v1028 = vsel %vm277, %v1013, 0
  %v1030 = vsel %vm277, %v1015, 0
  %v1032 = vsel %vm277, %v1017, 0
  %v1034 = vsel %vm277, %v1019, 0
  %v1036 = vsel %vm277, %v1021, 0
  %v1038 = vsel %vm277, %v1023, 0
  %v1040 = vsel %vm277, %v1025, 0
  %v1042 = vsel %vm277, %v1027, 0
  %1044 = vmatprep.subr.mxu0 0.0
  %1045 = vmatpush1.xpose.msra.mxu0 %v1036
  %1046 = vmatprep.subr.mxu0 0.0
  %1047 = vmatpush1.xpose.msra.mxu0 %v1038
  %1048 = vmatprep.subr.mxu0 0.0
  %1049 = vmatpush1.xpose.msra.mxu0 %v1040
  %1050 = vmatprep.subr.mxu0 0.0
  %1051 = vmatpush1.xpose.msra.mxu0 %v1042
  %1052 = vmatprep.subr.mxu0 0.0
  %1053 = vmatpush1.xpose.msra.mxu0 0.0
  %1054 = vmatprep.subr.mxu0 0.0
  %1055 = vmatpush1.xpose.msra.mxu0 0.0
  %1056 = vmatprep.subr.mxu0 0.0
  %1057 = vmatpush1.xpose.msra.mxu0 0.0
  %1058 = vmatprep.subr.mxu0 0.0
  %1059 = vmatpush1.xpose.msra.mxu0 0.0
  %1060 = vmatprep.subr.mxu0 0.0
  %1061 = vmatpush1.xpose.msra.mxu0 0.0
  %1062 = vmatprep.subr.mxu0 0.0
  %1063 = vmatpush1.xpose.msra.mxu0 0.0
  %1064 = vmatprep.subr.mxu0 0.0
  %1065 = vmatpush1.xpose.msra.mxu0 0.0
  %1066 = vmatprep.subr.mxu0 0.0
  %1067 = vmatpush1.xpose.msra.mxu0 0.0
  %1068 = vmatprep.subr.mxu0 0.0
  %1069 = vmatpush1.xpose.msra.mxu0 0.0
  %1070 = vmatprep.subr.mxu0 0.0
  %1071 = vmatpush1.xpose.msra.mxu0 0.0
  %1072 = vmatprep.subr.mxu0 0.0
  %1073 = vmatpush1.xpose.msra.mxu0 0.0
  %1074 = vmatprep.subr.mxu0 0.0
  %1075 = vmatpush1.xpose.msra.mxu0 0.0
  %1076 = vmatprep.subr.mxu0 0.0
  %1077 = vmatpush1.xpose.msra.mxu0 0.0
  %1078 = vmatprep.subr.mxu0 0.0
  %1079 = vmatpush1.xpose.msra.mxu0 0.0
  %1080 = vmatprep.subr.mxu0 0.0
  %1081 = vmatpush1.xpose.msra.mxu0 0.0
  %1082 = vmatprep.subr.mxu0 0.0
  %1083 = vmatpush1.xpose.msra.mxu0 0.0
  %1084 = vmatprep.subr.mxu0 0.0
  %1085 = vmatpush1.xpose.msra.mxu0 0.0
  %1086 = vmatprep.subr.mxu0 0.0
  %1087 = vmatpush1.xpose.msra.mxu0 0.0
  %1088 = vmatprep.subr.mxu0 0.0
  %1089 = vmatpush1.xpose.msra.mxu0 0.0
  %1090 = vmatprep.subr.mxu0 0.0
  %1091 = vmatpush1.xpose.msra.mxu0 0.0
  %1092 = vmatprep.subr.mxu0 0.0
  %1093 = vmatpush1.xpose.msra.mxu0 0.0
  %1094 = vmatprep.subr.mxu0 0.0
  %1095 = vmatpush1.xpose.msra.mxu0 0.0
  %1096 = vmatprep.subr.mxu0 0.0
  %1097 = vmatpush1.xpose.msra.mxu0 0.0
  %1098 = vmatprep.subr.mxu0 0.0
  %1099 = vmatpush1.xpose.msra.mxu0 0.0
  %1100 = vmatprep.subr.mxu0 0.0
  %1101 = vmatpush1.xpose.msra.mxu0 0.0
  %1102 = vmatprep.subr.mxu0 0.0
  %1103 = vmatpush1.xpose.msra.mxu0 0.0
  %1104 = vmatprep.subr.mxu0 0.0
  %1105 = vmatpush1.xpose.msra.mxu0 0.0
  %1106 = vmatprep.subr.mxu0 0.0
  %1107 = vmatpush1.xpose.msra.mxu0 0.0
  %1108 = vmatprep.mubr.f32.mxu0 0.0
  %1109 = vmatmul.mubr.f32.gmra.mrb[0].mxu0 %v1028
  %v1110 = vpop.f32.mrb[0].mxu0
  %v1111 = vadd.f32 0.0, %v1110
  %v1112 = vpop.f32.mrb[0].mxu0
  %1113 = vmatprep.mubr.f32.mxu0 0.0
  %1114 = vmatmul.mubr.f32.gmra.mrb[0].mxu0 %v1030
  %v1115 = vpop.f32.mrb[0].mxu0
  %v1116 = vadd.f32 0.0, %v1115
  %v1117 = vpop.f32.mrb[0].mxu0
  %1118 = vmatprep.mubr.f32.mxu0 0.0
  %1119 = vmatmul.mubr.f32.gmra.mrb[0].mxu0 %v1032
  %v1120 = vpop.f32.mrb[0].mxu0
  %v1121 = vadd.f32 0.0, %v1120
  %v1122 = vpop.f32.mrb[0].mxu0
  %1123 = vmatprep.mubr.f32.mxu0 0.0
  %1124 = vmatmul.mubr.f32.gmra.mrb[0].mxu0 %v1034
  %v1125 = vpop.f32.mrb[0].mxu0
  %v1126 = vadd.f32 0.0, %v1125
  %v1127 = vpop.f32.mrb[0].mxu0
  %1128 = vdwg.mxu0
  %v1129 = vmul.f32 %v1111, 0.35355338
  %v1130 = vmul.f32 %v1116, 0.35355338
  %v1131 = vmul.f32 %v1121, 0.35355338
  %v1132 = vmul.f32 %v1126, 0.35355338
  %v1133 = vadd.f32 %v1129, %v43
  %v1134 = vadd.f32 %v1130, %v44
  %v1135 = vadd.f32 %v1131, %v45
  %v1136 = vadd.f32 %v1132, %v46
  %v1137 = vsel %vm163, %v1133, -inf
  %1138 = vmax.xlane.f32.xlu0 %v1137
  %v1139 = vpop.xlane.xlu0 %1138
  %v1140 = vsel %vm163, %v1134, -inf
  %1141 = vmax.xlane.f32.xlu0 %v1140
  %v1142 = vpop.xlane.xlu0 %1141
  %v1143 = vsel %vm163, %v1135, -inf
  %1144 = vmax.xlane.f32.xlu0 %v1143
  %v1145 = vpop.xlane.xlu0 %1144
  %v1146 = vsel %vm163, %v1136, -inf
  %1147 = vmax.xlane.f32.xlu0 %v1146
  %v1148 = vpop.xlane.xlu0 %1147
  %v1149 = vsub.f32 %v1133, %v1139
  %v1150 = vsub.f32 %v1134, %v1142
  %v1151 = vsub.f32 %v1135, %v1145
  %v1152 = vsub.f32 %v1136, %v1148
  %v1153 = vmul.f32 %v1149, 1.442695
  %v1154 = vpow.pop %v1153
  %v1155 = vmul.f32 %v1150, 1.442695
  %v1156 = vpow.pop %v1155
  %v1157 = vmul.f32 %v1151, 1.442695
  %v1158 = vpow.pop %v1157
  %v1159 = vmul.f32 %v1152, 1.442695
  %v1160 = vpow.pop %v1159
  %v1161 = vsel %vm163, %v1154, 0.0
  %1162 = vadd.xlane.f32.xlu0 %v1161
  %v1163 = vpop.xlane.xlu0 %1162
  %v1164 = vsel %vm163, %v1156, 0.0
  %1165 = vadd.xlane.f32.xlu0 %v1164
  %v1166 = vpop.xlane.xlu0 %1165
  %v1167 = vsel %vm163, %v1158, 0.0
  %1168 = vadd.xlane.f32.xlu0 %v1167
  %v1169 = vpop.xlane.xlu0 %1168
  %v1170 = vsel %vm163, %v1160, 0.0
  %1171 = vadd.xlane.f32.xlu0 %v1170
  %v1172 = vpop.xlane.xlu0 %1171
  %v1173 = vrcp.pop %v1163
  %v1174 = vrcp.pop %v1166
  %v1175 = vrcp.pop %v1169
  %v1176 = vrcp.pop %v1172
  %v1177 = vmul.f32 %v1154, %v1173
  %v1178 = vmul.f32 %v1156, %v1174
  %v1179 = vmul.f32 %v1158, %v1175
  %v1180 = vmul.f32 %v1160, %v1176
  %1181 = vrot.lane.b32.xlu0 %v243, 48
  %v1182 = vpop.permute.xlu0 %1181
  %1183 = vrot.lane.b32.xlu0 %v248, 48
  %v1184 = vpop.permute.xlu0 %1183
  %1185 = vrot.lane.b32.xlu0 %v253, 48
  %v1186 = vpop.permute.xlu0 %1185
  %1187 = vrot.lane.b32.xlu0 %v258, 48
  %v1188 = vpop.permute.xlu0 %1187
  %v1194 = vsel %vm163, %v1177, 0
  %v1197 = vsel %vm163, %v1178, 0
  %v1200 = vsel %vm163, %v1179, 0
  %v1203 = vsel %vm163, %v1180, 0
  %1205 = vmatprep.subr.mxu0 0.0
  %1206 = vmatpush1.msra.mxu0 %v1182
  %1207 = vmatprep.subr.mxu0 0.0
  %1208 = vmatpush1.msra.mxu0 %v1184
  %1209 = vmatprep.subr.mxu0 0.0
  %1210 = vmatpush1.msra.mxu0 %v1186
  %1211 = vmatprep.subr.mxu0 0.0
  %1212 = vmatpush1.msra.mxu0 %v1188
  %1213 = vmatprep.subr.mxu0 0.0
  %1214 = vmatpush1.msra.mxu0 0.0
  %1215 = vmatprep.subr.mxu0 0.0
  %1216 = vmatpush1.msra.mxu0 0.0
  %1217 = vmatprep.subr.mxu0 0.0
  %1218 = vmatpush1.msra.mxu0 0.0
  %1219 = vmatprep.subr.mxu0 0.0
  %1220 = vmatpush1.msra.mxu0 0.0
  %1221 = vmatprep.subr.mxu0 0.0
  %1222 = vmatpush1.msra.mxu0 0.0
  %1223 = vmatprep.subr.mxu0 0.0
  %1224 = vmatpush1.msra.mxu0 0.0
  %1225 = vmatprep.subr.mxu0 0.0
  %1226 = vmatpush1.msra.mxu0 0.0
  %1227 = vmatprep.subr.mxu0 0.0
  %1228 = vmatpush1.msra.mxu0 0.0
  %1229 = vmatprep.subr.mxu0 0.0
  %1230 = vmatpush1.msra.mxu0 0.0
  %1231 = vmatprep.subr.mxu0 0.0
  %1232 = vmatpush1.msra.mxu0 0.0
  %1233 = vmatprep.subr.mxu0 0.0
  %1234 = vmatpush1.msra.mxu0 0.0
  %1235 = vmatprep.subr.mxu0 0.0
  %1236 = vmatpush1.msra.mxu0 0.0
  %1237 = vmatprep.subr.mxu0 0.0
  %1238 = vmatpush1.msra.mxu0 0.0
  %1239 = vmatprep.subr.mxu0 0.0
  %1240 = vmatpush1.msra.mxu0 0.0
  %1241 = vmatprep.subr.mxu0 0.0
  %1242 = vmatpush1.msra.mxu0 0.0
  %1243 = vmatprep.subr.mxu0 0.0
  %1244 = vmatpush1.msra.mxu0 0.0
  %1245 = vmatprep.subr.mxu0 0.0
  %1246 = vmatpush1.msra.mxu0 0.0
  %1247 = vmatprep.subr.mxu0 0.0
  %1248 = vmatpush1.msra.mxu0 0.0
  %1249 = vmatprep.subr.mxu0 0.0
  %1250 = vmatpush1.msra.mxu0 0.0
  %1251 = vmatprep.subr.mxu0 0.0
  %1252 = vmatpush1.msra.mxu0 0.0
  %1253 = vmatprep.subr.mxu0 0.0
  %1254 = vmatpush1.msra.mxu0 0.0
  %1255 = vmatprep.subr.mxu0 0.0
  %1256 = vmatpush1.msra.mxu0 0.0
  %1257 = vmatprep.subr.mxu0 0.0
  %1258 = vmatpush1.msra.mxu0 0.0
  %1259 = vmatprep.subr.mxu0 0.0
  %1260 = vmatpush1.msra.mxu0 0.0
  %1261 = vmatprep.subr.mxu0 0.0
  %1262 = vmatpush1.msra.mxu0 0.0
  %1263 = vmatprep.subr.mxu0 0.0
  %1264 = vmatpush1.msra.mxu0 0.0
  %1265 = vmatprep.subr.mxu0 0.0
  %1266 = vmatpush1.msra.mxu0 0.0
  %1267 = vmatprep.subr.mxu0 0.0
  %1268 = vmatpush1.msra.mxu0 0.0
  %1269 = vmatprep.mubr.f32.mxu0 0.0
  %1270 = vmatmul.mubr.f32.gmra.mrb[0].mxu0 %v1194
  %v1271 = vpop.f32.mrb[0].mxu0
  %v1272 = vadd.f32 0.0, %v1271
  %v1273 = vpop.f32.mrb[0].mxu0
  %1274 = vmatprep.mubr.f32.mxu0 0.0
  %1275 = vmatmul.mubr.f32.gmra.mrb[0].mxu0 %v1197
  %v1276 = vpop.f32.mrb[0].mxu0
  %v1277 = vadd.f32 0.0, %v1276
  %v1278 = vpop.f32.mrb[0].mxu0
  %1279 = vmatprep.mubr.f32.mxu0 0.0
  %1280 = vmatmul.mubr.f32.gmra.mrb[0].mxu0 %v1200
  %v1281 = vpop.f32.mrb[0].mxu0
  %v1282 = vadd.f32 0.0, %v1281
  %v1283 = vpop.f32.mrb[0].mxu0
  %1284 = vmatprep.mubr.f32.mxu0 0.0
  %1285 = vmatmul.mubr.f32.gmra.mrb[0].mxu0 %v1203
  %v1286 = vpop.f32.mrb[0].mxu0
  %v1287 = vadd.f32 0.0, %v1286
  %v1288 = vpop.f32.mrb[0].mxu0
  %1289 = vdwg.mxu0
  %v1291 = vsel %vm277, %v1272, 0
  %v1294 = vsel %vm277, %v1277, 0
  %v1297 = vsel %vm277, %v1282, 0
  %v1300 = vsel %vm277, %v1287, 0
  %1302 = vmatprep.subr.mxu0 0.0
  %1303 = vmatpush1.msra.mxu0 %v263
  %1304 = vmatprep.subr.mxu0 0.0
  %1305 = vmatpush1.msra.mxu0 0.0
  %1306 = vmatprep.subr.mxu0 0.0
  %1307 = vmatpush1.msra.mxu0 0.0
  %1308 = vmatprep.subr.mxu0 0.0
  %1309 = vmatpush1.msra.mxu0 0.0
  %1310 = vmatprep.subr.mxu0 0.0
  %1311 = vmatpush1.msra.mxu0 0.0
  %1312 = vmatprep.subr.mxu0 0.0
  %1313 = vmatpush1.msra.mxu0 0.0
  %1314 = vmatprep.subr.mxu0 0.0
  %1315 = vmatpush1.msra.mxu0 0.0
  %1316 = vmatprep.subr.mxu0 0.0
  %1317 = vmatpush1.msra.mxu0 0.0
  %1318 = vmatprep.subr.mxu0 0.0
  %1319 = vmatpush1.msra.mxu0 0.0
  %1320 = vmatprep.subr.mxu0 0.0
  %1321 = vmatpush1.msra.mxu0 0.0
  %1322 = vmatprep.subr.mxu0 0.0
  %1323 = vmatpush1.msra.mxu0 0.0
  %1324 = vmatprep.subr.mxu0 0.0
  %1325 = vmatpush1.msra.mxu0 0.0
  %1326 = vmatprep.subr.mxu0 0.0
  %1327 = vmatpush1.msra.mxu0 0.0
  %1328 = vmatprep.subr.mxu0 0.0
  %1329 = vmatpush1.msra.mxu0 0.0
  %1330 = vmatprep.subr.mxu0 0.0
  %1331 = vmatpush1.msra.mxu0 0.0
  %1332 = vmatprep.subr.mxu0 0.0
  %1333 = vmatpush1.msra.mxu0 0.0
  %1334 = vmatprep.subr.mxu0 0.0
  %1335 = vmatpush1.msra.mxu0 0.0
  %1336 = vmatprep.subr.mxu0 0.0
  %1337 = vmatpush1.msra.mxu0 0.0
  %1338 = vmatprep.subr.mxu0 0.0
  %1339 = vmatpush1.msra.mxu0 0.0
  %1340 = vmatprep.subr.mxu0 0.0
  %1341 = vmatpush1.msra.mxu0 0.0
  %1342 = vmatprep.subr.mxu0 0.0
  %1343 = vmatpush1.msra.mxu0 0.0
  %1344 = vmatprep.subr.mxu0 0.0
  %1345 = vmatpush1.msra.mxu0 0.0
  %1346 = vmatprep.subr.mxu0 0.0
  %1347 = vmatpush1.msra.mxu0 0.0
  %1348 = vmatprep.subr.mxu0 0.0
  %1349 = vmatpush1.msra.mxu0 0.0
  %1350 = vmatprep.subr.mxu0 0.0
  %1351 = vmatpush1.msra.mxu0 0.0
  %1352 = vmatprep.subr.mxu0 0.0
  %1353 = vmatpush1.msra.mxu0 0.0
  %1354 = vmatprep.subr.mxu0 0.0
  %1355 = vmatpush1.msra.mxu0 0.0
  %1356 = vmatprep.subr.mxu0 0.0
  %1357 = vmatpush1.msra.mxu0 0.0
  %1358 = vmatprep.subr.mxu0 0.0
  %1359 = vmatpush1.msra.mxu0 0.0
  %1360 = vmatprep.subr.mxu0 0.0
  %1361 = vmatpush1.msra.mxu0 0.0
  %1362 = vmatprep.subr.mxu0 0.0
  %1363 = vmatpush1.msra.mxu0 0.0
  %1364 = vmatprep.subr.mxu0 0.0
  %1365 = vmatpush1.msra.mxu0 0.0
  %1366 = vmatprep.mubr.f32.mxu0 0.0
  %1367 = vmatmul.mubr.f32.gmra.mrb[0].mxu0 %v1291
  %v1368 = vpop.f32.mrb[0].mxu0
  %v1369 = vadd.f32 0.0, %v1368
  %v1370 = vpop.f32.mrb[0].mxu0
  %1371 = vmatprep.mubr.f32.mxu0 0.0
  %1372 = vmatmul.mubr.f32.gmra.mrb[0].mxu0 %v1294
  %v1373 = vpop.f32.mrb[0].mxu0
  %v1374 = vadd.f32 0.0, %v1373
  %v1375 = vpop.f32.mrb[0].mxu0
  %1376 = vmatprep.mubr.f32.mxu0 0.0
  %1377 = vmatmul.mubr.f32.gmra.mrb[0].mxu0 %v1297
  %v1378 = vpop.f32.mrb[0].mxu0
  %v1379 = vadd.f32 0.0, %v1378
  %v1380 = vpop.f32.mrb[0].mxu0
  %1381 = vmatprep.mubr.f32.mxu0 0.0
  %1382 = vmatmul.mubr.f32.gmra.mrb[0].mxu0 %v1300
  %v1383 = vpop.f32.mrb[0].mxu0
  %v1384 = vadd.f32 0.0, %v1383
  %v1385 = vpop.f32.mrb[0].mxu0
  %1386 = vdwg.mxu0
  %v1387 = vadd.f32 %v994, %v1369
  %v1388 = vadd.f32 %v999, %v1374
  %v1389 = vadd.f32 %v1004, %v1379
  %v1390 = vadd.f32 %v1009, %v1384
  %1391 = vrot.lane.b32.xlu0 %v243, 104
  %v1392 = vpop.permute.xlu0 %1391
  %1393 = vrot.lane.b32.xlu0 %v248, 104
  %v1394 = vpop.permute.xlu0 %1393
  %1395 = vrot.lane.b32.xlu0 %v253, 104
  %v1396 = vpop.permute.xlu0 %1395
  %1397 = vrot.lane.b32.xlu0 %v258, 104
  %v1398 = vpop.permute.xlu0 %1397
  %1399 = vrot.lane.b32.xlu0 %v243, 72
  %v1400 = vpop.permute.xlu0 %1399
  %1401 = vrot.lane.b32.xlu0 %v248, 72
  %v1402 = vpop.permute.xlu0 %1401
  %1403 = vrot.lane.b32.xlu0 %v253, 72
  %v1404 = vpop.permute.xlu0 %1403
  %1405 = vrot.lane.b32.xlu0 %v258, 72
  %v1406 = vpop.permute.xlu0 %1405
  %v1407 = vsel %vm277, %v1392, 0
  %v1409 = vsel %vm277, %v1394, 0
  %v1411 = vsel %vm277, %v1396, 0
  %v1413 = vsel %vm277, %v1398, 0
  %v1415 = vsel %vm277, %v1400, 0
  %v1417 = vsel %vm277, %v1402, 0
  %v1419 = vsel %vm277, %v1404, 0
  %v1421 = vsel %vm277, %v1406, 0
  %1423 = vmatprep.subr.mxu0 0.0
  %1424 = vmatpush1.xpose.msra.mxu0 %v1415
  %1425 = vmatprep.subr.mxu0 0.0
  %1426 = vmatpush1.xpose.msra.mxu0 %v1417
  %1427 = vmatprep.subr.mxu0 0.0
  %1428 = vmatpush1.xpose.msra.mxu0 %v1419
  %1429 = vmatprep.subr.mxu0 0.0
  %1430 = vmatpush1.xpose.msra.mxu0 %v1421
  %1431 = vmatprep.subr.mxu0 0.0
  %1432 = vmatpush1.xpose.msra.mxu0 0.0
  %1433 = vmatprep.subr.mxu0 0.0
  %1434 = vmatpush1.xpose.msra.mxu0 0.0
  %1435 = vmatprep.subr.mxu0 0.0
  %1436 = vmatpush1.xpose.msra.mxu0 0.0
  %1437 = vmatprep.subr.mxu0 0.0
  %1438 = vmatpush1.xpose.msra.mxu0 0.0
  %1439 = vmatprep.subr.mxu0 0.0
  %1440 = vmatpush1.xpose.msra.mxu0 0.0
  %1441 = vmatprep.subr.mxu0 0.0
  %1442 = vmatpush1.xpose.msra.mxu0 0.0
  %1443 = vmatprep.subr.mxu0 0.0
  %1444 = vmatpush1.xpose.msra.mxu0 0.0
  %1445 = vmatprep.subr.mxu0 0.0
  %1446 = vmatpush1.xpose.msra.mxu0 0.0
  %1447 = vmatprep.subr.mxu0 0.0
  %1448 = vmatpush1.xpose.msra.mxu0 0.0
  %1449 = vmatprep.subr.mxu0 0.0
  %1450 = vmatpush1.xpose.msra.mxu0 0.0
  %1451 = vmatprep.subr.mxu0 0.0
  %1452 = vmatpush1.xpose.msra.mxu0 0.0
  %1453 = vmatprep.subr.mxu0 0.0
  %1454 = vmatpush1.xpose.msra.mxu0 0.0
  %1455 = vmatprep.subr.mxu0 0.0
  %1456 = vmatpush1.xpose.msra.mxu0 0.0
  %1457 = vmatprep.subr.mxu0 0.0
  %1458 = vmatpush1.xpose.msra.mxu0 0.0
  %1459 = vmatprep.subr.mxu0 0.0
  %1460 = vmatpush1.xpose.msra.mxu0 0.0
  %1461 = vmatprep.subr.mxu0 0.0
  %1462 = vmatpush1.xpose.msra.mxu0 0.0
  %1463 = vmatprep.subr.mxu0 0.0
  %1464 = vmatpush1.xpose.msra.mxu0 0.0
  %1465 = vmatprep.subr.mxu0 0.0
  %1466 = vmatpush1.xpose.msra.mxu0 0.0
  %1467 = vmatprep.subr.mxu0 0.0
  %1468 = vmatpush1.xpose.msra.mxu0 0.0
  %1469 = vmatprep.subr.mxu0 0.0
  %1470 = vmatpush1.xpose.msra.mxu0 0.0
  %1471 = vmatprep.subr.mxu0 0.0
  %1472 = vmatpush1.xpose.msra.mxu0 0.0
  %1473 = vmatprep.subr.mxu0 0.0
  %1474 = vmatpush1.xpose.msra.mxu0 0.0
  %1475 = vmatprep.subr.mxu0 0.0
  %1476 = vmatpush1.xpose.msra.mxu0 0.0
  %1477 = vmatprep.subr.mxu0 0.0
  %1478 = vmatpush1.xpose.msra.mxu0 0.0
  %1479 = vmatprep.subr.mxu0 0.0
  %1480 = vmatpush1.xpose.msra.mxu0 0.0
  %1481 = vmatprep.subr.mxu0 0.0
  %1482 = vmatpush1.xpose.msra.mxu0 0.0
  %1483 = vmatprep.subr.mxu0 0.0
  %1484 = vmatpush1.xpose.msra.mxu0 0.0
  %1485 = vmatprep.subr.mxu0 0.0
  %1486 = vmatpush1.xpose.msra.mxu0 0.0
  %1487 = vmatprep.mubr.f32.mxu0 0.0
  %1488 = vmatmul.mubr.f32.gmra.mrb[0].mxu0 %v1407
  %v1489 = vpop.f32.mrb[0].mxu0
  %v1490 = vadd.f32 0.0, %v1489
  %v1491 = vpop.f32.mrb[0].mxu0
  %1492 = vmatprep.mubr.f32.mxu0 0.0
  %1493 = vmatmul.mubr.f32.gmra.mrb[0].mxu0 %v1409
  %v1494 = vpop.f32.mrb[0].mxu0
  %v1495 = vadd.f32 0.0, %v1494
  %v1496 = vpop.f32.mrb[0].mxu0
  %1497 = vmatprep.mubr.f32.mxu0 0.0
  %1498 = vmatmul.mubr.f32.gmra.mrb[0].mxu0 %v1411
  %v1499 = vpop.f32.mrb[0].mxu0
  %v1500 = vadd.f32 0.0, %v1499
  %v1501 = vpop.f32.mrb[0].mxu0
  %1502 = vmatprep.mubr.f32.mxu0 0.0
  %1503 = vmatmul.mubr.f32.gmra.mrb[0].mxu0 %v1413
  %v1504 = vpop.f32.mrb[0].mxu0
  %v1505 = vadd.f32 0.0, %v1504
  %v1506 = vpop.f32.mrb[0].mxu0
  %1507 = vdwg.mxu0
  %v1508 = vmul.f32 %v1490, 0.35355338
  %v1509 = vmul.f32 %v1495, 0.35355338
  %v1510 = vmul.f32 %v1500, 0.35355338
  %v1511 = vmul.f32 %v1505, 0.35355338
  %v1512 = vadd.f32 %v1508, %v43
  %v1513 = vadd.f32 %v1509, %v44
  %v1514 = vadd.f32 %v1510, %v45
  %v1515 = vadd.f32 %v1511, %v46
  %v1516 = vsel %vm163, %v1512, -inf
  %1517 = vmax.xlane.f32.xlu0 %v1516
  %v1518 = vpop.xlane.xlu0 %1517
  %v1519 = vsel %vm163, %v1513, -inf
  %1520 = vmax.xlane.f32.xlu0 %v1519
  %v1521 = vpop.xlane.xlu0 %1520
  %v1522 = vsel %vm163, %v1514, -inf
  %1523 = vmax.xlane.f32.xlu0 %v1522
  %v1524 = vpop.xlane.xlu0 %1523
  %v1525 = vsel %vm163, %v1515, -inf
  %1526 = vmax.xlane.f32.xlu0 %v1525
  %v1527 = vpop.xlane.xlu0 %1526
  %v1528 = vsub.f32 %v1512, %v1518
  %v1529 = vsub.f32 %v1513, %v1521
  %v1530 = vsub.f32 %v1514, %v1524
  %v1531 = vsub.f32 %v1515, %v1527
  %v1532 = vmul.f32 %v1528, 1.442695
  %v1533 = vpow.pop %v1532
  %v1534 = vmul.f32 %v1529, 1.442695
  %v1535 = vpow.pop %v1534
  %v1536 = vmul.f32 %v1530, 1.442695
  %v1537 = vpow.pop %v1536
  %v1538 = vmul.f32 %v1531, 1.442695
  %v1539 = vpow.pop %v1538
  %v1540 = vsel %vm163, %v1533, 0.0
  %1541 = vadd.xlane.f32.xlu0 %v1540
  %v1542 = vpop.xlane.xlu0 %1541
  %v1543 = vsel %vm163, %v1535, 0.0
  %1544 = vadd.xlane.f32.xlu0 %v1543
  %v1545 = vpop.xlane.xlu0 %1544
  %v1546 = vsel %vm163, %v1537, 0.0
  %1547 = vadd.xlane.f32.xlu0 %v1546
  %v1548 = vpop.xlane.xlu0 %1547
  %v1549 = vsel %vm163, %v1539, 0.0
  %1550 = vadd.xlane.f32.xlu0 %v1549
  %v1551 = vpop.xlane.xlu0 %1550
  %v1552 = vrcp.pop %v1542
  %v1553 = vrcp.pop %v1545
  %v1554 = vrcp.pop %v1548
  %v1555 = vrcp.pop %v1551
  %v1556 = vmul.f32 %v1533, %v1552
  %v1557 = vmul.f32 %v1535, %v1553
  %v1558 = vmul.f32 %v1537, %v1554
  %v1559 = vmul.f32 %v1539, %v1555
  %1560 = vrot.lane.b32.xlu0 %v243, 40
  %v1561 = vpop.permute.xlu0 %1560
  %1562 = vrot.lane.b32.xlu0 %v248, 40
  %v1563 = vpop.permute.xlu0 %1562
  %1564 = vrot.lane.b32.xlu0 %v253, 40
  %v1565 = vpop.permute.xlu0 %1564
  %1566 = vrot.lane.b32.xlu0 %v258, 40
  %v1567 = vpop.permute.xlu0 %1566
  %v1573 = vsel %vm163, %v1556, 0
  %v1576 = vsel %vm163, %v1557, 0
  %v1579 = vsel %vm163, %v1558, 0
  %v1582 = vsel %vm163, %v1559, 0
  %1584 = vmatprep.subr.mxu0 0.0
  %1585 = vmatpush1.msra.mxu0 %v1561
  %1586 = vmatprep.subr.mxu0 0.0
  %1587 = vmatpush1.msra.mxu0 %v1563
  %1588 = vmatprep.subr.mxu0 0.0
  %1589 = vmatpush1.msra.mxu0 %v1565
  %1590 = vmatprep.subr.mxu0 0.0
  %1591 = vmatpush1.msra.mxu0 %v1567
  %1592 = vmatprep.subr.mxu0 0.0
  %1593 = vmatpush1.msra.mxu0 0.0
  %1594 = vmatprep.subr.mxu0 0.0
  %1595 = vmatpush1.msra.mxu0 0.0
  %1596 = vmatprep.subr.mxu0 0.0
  %1597 = vmatpush1.msra.mxu0 0.0
  %1598 = vmatprep.subr.mxu0 0.0
  %1599 = vmatpush1.msra.mxu0 0.0
  %1600 = vmatprep.subr.mxu0 0.0
  %1601 = vmatpush1.msra.mxu0 0.0
  %1602 = vmatprep.subr.mxu0 0.0
  %1603 = vmatpush1.msra.mxu0 0.0
  %1604 = vmatprep.subr.mxu0 0.0
  %1605 = vmatpush1.msra.mxu0 0.0
  %1606 = vmatprep.subr.mxu0 0.0
  %1607 = vmatpush1.msra.mxu0 0.0
  %1608 = vmatprep.subr.mxu0 0.0
  %1609 = vmatpush1.msra.mxu0 0.0
  %1610 = vmatprep.subr.mxu0 0.0
  %1611 = vmatpush1.msra.mxu0 0.0
  %1612 = vmatprep.subr.mxu0 0.0
  %1613 = vmatpush1.msra.mxu0 0.0
  %1614 = vmatprep.subr.mxu0 0.0
  %1615 = vmatpush1.msra.mxu0 0.0
  %1616 = vmatprep.subr.mxu0 0.0
  %1617 = vmatpush1.msra.mxu0 0.0
  %1618 = vmatprep.subr.mxu0 0.0
  %1619 = vmatpush1.msra.mxu0 0.0
  %1620 = vmatprep.subr.mxu0 0.0
  %1621 = vmatpush1.msra.mxu0 0.0
  %1622 = vmatprep.subr.mxu0 0.0
  %1623 = vmatpush1.msra.mxu0 0.0
  %1624 = vmatprep.subr.mxu0 0.0
  %1625 = vmatpush1.msra.mxu0 0.0
  %1626 = vmatprep.subr.mxu0 0.0
  %1627 = vmatpush1.msra.mxu0 0.0
  %1628 = vmatprep.subr.mxu0 0.0
  %1629 = vmatpush1.msra.mxu0 0.0
  %1630 = vmatprep.subr.mxu0 0.0
  %1631 = vmatpush1.msra.mxu0 0.0
  %1632 = vmatprep.subr.mxu0 0.0
  %1633 = vmatpush1.msra.mxu0 0.0
  %1634 = vmatprep.subr.mxu0 0.0
  %1635 = vmatpush1.msra.mxu0 0.0
  %1636 = vmatprep.subr.mxu0 0.0
  %1637 = vmatpush1.msra.mxu0 0.0
  %1638 = vmatprep.subr.mxu0 0.0
  %1639 = vmatpush1.msra.mxu0 0.0
  %1640 = vmatprep.subr.mxu0 0.0
  %1641 = vmatpush1.msra.mxu0 0.0
  %1642 = vmatprep.subr.mxu0 0.0
  %1643 = vmatpush1.msra.mxu0 0.0
  %1644 = vmatprep.subr.mxu0 0.0
  %1645 = vmatpush1.msra.mxu0 0.0
  %1646 = vmatprep.subr.mxu0 0.0
  %1647 = vmatpush1.msra.mxu0 0.0
  %1648 = vmatprep.mubr.f32.mxu0 0.0
  %1649 = vmatmul.mubr.f32.gmra.mrb[0].mxu0 %v1573
  %v1650 = vpop.f32.mrb[0].mxu0
  %v1651 = vadd.f32 0.0, %v1650
  %v1652 = vpop.f32.mrb[0].mxu0
  %1653 = vmatprep.mubr.f32.mxu0 0.0
  %1654 = vmatmul.mubr.f32.gmra.mrb[0].mxu0 %v1576
  %v1655 = vpop.f32.mrb[0].mxu0
  %v1656 = vadd.f32 0.0, %v1655
  %v1657 = vpop.f32.mrb[0].mxu0
  %1658 = vmatprep.mubr.f32.mxu0 0.0
  %1659 = vmatmul.mubr.f32.gmra.mrb[0].mxu0 %v1579
  %v1660 = vpop.f32.mrb[0].mxu0
  %v1661 = vadd.f32 0.0, %v1660
  %v1662 = vpop.f32.mrb[0].mxu0
  %1663 = vmatprep.mubr.f32.mxu0 0.0
  %1664 = vmatmul.mubr.f32.gmra.mrb[0].mxu0 %v1582
  %v1665 = vpop.f32.mrb[0].mxu0
  %v1666 = vadd.f32 0.0, %v1665
  %v1667 = vpop.f32.mrb[0].mxu0
  %1668 = vdwg.mxu0
  %v1670 = vsel %vm277, %v1651, 0
  %v1673 = vsel %vm277, %v1656, 0
  %v1676 = vsel %vm277, %v1661, 0
  %v1679 = vsel %vm277, %v1666, 0
  %1681 = vmatprep.subr.mxu0 0.0
  %1682 = vmatpush1.msra.mxu0 %v264
  %1683 = vmatprep.subr.mxu0 0.0
  %1684 = vmatpush1.msra.mxu0 0.0
  %1685 = vmatprep.subr.mxu0 0.0
  %1686 = vmatpush1.msra.mxu0 0.0
  %1687 = vmatprep.subr.mxu0 0.0
  %1688 = vmatpush1.msra.mxu0 0.0
  %1689 = vmatprep.subr.mxu0 0.0
  %1690 = vmatpush1.msra.mxu0 0.0
  %1691 = vmatprep.subr.mxu0 0.0
  %1692 = vmatpush1.msra.mxu0 0.0
  %1693 = vmatprep.subr.mxu0 0.0
  %1694 = vmatpush1.msra.mxu0 0.0
  %1695 = vmatprep.subr.mxu0 0.0
  %1696 = vmatpush1.msra.mxu0 0.0
  %1697 = vmatprep.subr.mxu0 0.0
  %1698 = vmatpush1.msra.mxu0 0.0
  %1699 = vmatprep.subr.mxu0 0.0
  %1700 = vmatpush1.msra.mxu0 0.0
  %1701 = vmatprep.subr.mxu0 0.0
  %1702 = vmatpush1.msra.mxu0 0.0
  %1703 = vmatprep.subr.mxu0 0.0
  %1704 = vmatpush1.msra.mxu0 0.0
  %1705 = vmatprep.subr.mxu0 0.0
  %1706 = vmatpush1.msra.mxu0 0.0
  %1707 = vmatprep.subr.mxu0 0.0
  %1708 = vmatpush1.msra.mxu0 0.0
  %1709 = vmatprep.subr.mxu0 0.0
  %1710 = vmatpush1.msra.mxu0 0.0
  %1711 = vmatprep.subr.mxu0 0.0
  %1712 = vmatpush1.msra.mxu0 0.0
  %1713 = vmatprep.subr.mxu0 0.0
  %1714 = vmatpush1.msra.mxu0 0.0
  %1715 = vmatprep.subr.mxu0 0.0
  %1716 = vmatpush1.msra.mxu0 0.0
  %1717 = vmatprep.subr.mxu0 0.0
  %1718 = vmatpush1.msra.mxu0 0.0
  %1719 = vmatprep.subr.mxu0 0.0
  %1720 = vmatpush1.msra.mxu0 0.0
  %1721 = vmatprep.subr.mxu0 0.0
  %1722 = vmatpush1.msra.mxu0 0.0
  %1723 = vmatprep.subr.mxu0 0.0
  %1724 = vmatpush1.msra.mxu0 0.0
  %1725 = vmatprep.subr.mxu0 0.0
  %1726 = vmatpush1.msra.mxu0 0.0
  %1727 = vmatprep.subr.mxu0 0.0
  %1728 = vmatpush1.msra.mxu0 0.0
  %1729 = vmatprep.subr.mxu0 0.0
  %1730 = vmatpush1.msra.mxu0 0.0
  %1731 = vmatprep.subr.mxu0 0.0
  %1732 = vmatpush1.msra.mxu0 0.0
  %1733 = vmatprep.subr.mxu0 0.0
  %1734 = vmatpush1.msra.mxu0 0.0
  %1735 = vmatprep.subr.mxu0 0.0
  %1736 = vmatpush1.msra.mxu0 0.0
  %1737 = vmatprep.subr.mxu0 0.0
  %1738 = vmatpush1.msra.mxu0 0.0
  %1739 = vmatprep.subr.mxu0 0.0
  %1740 = vmatpush1.msra.mxu0 0.0
  %1741 = vmatprep.subr.mxu0 0.0
  %1742 = vmatpush1.msra.mxu0 0.0
  %1743 = vmatprep.subr.mxu0 0.0
  %1744 = vmatpush1.msra.mxu0 0.0
  %1745 = vmatprep.mubr.f32.mxu0 0.0
  %1746 = vmatmul.mubr.f32.gmra.mrb[0].mxu0 %v1670
  %v1747 = vpop.f32.mrb[0].mxu0
  %v1748 = vadd.f32 0.0, %v1747
  %v1749 = vpop.f32.mrb[0].mxu0
  %1750 = vmatprep.mubr.f32.mxu0 0.0
  %1751 = vmatmul.mubr.f32.gmra.mrb[0].mxu0 %v1673
  %v1752 = vpop.f32.mrb[0].mxu0
  %v1753 = vadd.f32 0.0, %v1752
  %v1754 = vpop.f32.mrb[0].mxu0
  %1755 = vmatprep.mubr.f32.mxu0 0.0
  %1756 = vmatmul.mubr.f32.gmra.mrb[0].mxu0 %v1676
  %v1757 = vpop.f32.mrb[0].mxu0
  %v1758 = vadd.f32 0.0, %v1757
  %v1759 = vpop.f32.mrb[0].mxu0
  %1760 = vmatprep.mubr.f32.mxu0 0.0
  %1761 = vmatmul.mubr.f32.gmra.mrb[0].mxu0 %v1679
  %v1762 = vpop.f32.mrb[0].mxu0
  %v1763 = vadd.f32 0.0, %v1762
  %v1764 = vpop.f32.mrb[0].mxu0
  %1765 = vdwg.mxu0
  %v1766 = vadd.f32 %v1387, %v1748
  %v1767 = vadd.f32 %v1388, %v1753
  %v1768 = vadd.f32 %v1389, %v1758
  %v1769 = vadd.f32 %v1390, %v1763
  %v1770 = vlaneseq
  %v1771 = vshrl.u32 %v1770, 7
  %v1772 = vsub.s32 1, %v1771
  %v1773 = vrot.slane %v41, %v1772
  %v1774 = vadd.f32 %v1766, %v1773
  %v1775 = vadd.f32 %v1767, %v1773
  %v1776 = vadd.f32 %v1768, %v1773
  %v1777 = vadd.f32 %v1769, %v1773
  %v1778 = vadd.f32 %v137, %v1774
  %v1779 = vadd.f32 %v142, %v1775
  %v1780 = vadd.f32 %v147, %v1776
  %v1781 = vadd.f32 %v152, %v1777
  %v1782 = vsel %vm163, %v1778, 0.0
  %1783 = vadd.xlane.f32.xlu0 %v1782
  %v1784 = vpop.xlane.xlu0 %1783
  %v1785 = vsel %vm163, %v1779, 0.0
  %1786 = vadd.xlane.f32.xlu0 %v1785
  %v1787 = vpop.xlane.xlu0 %1786
  %v1788 = vsel %vm163, %v1780, 0.0
  %1789 = vadd.xlane.f32.xlu0 %v1788
  %v1790 = vpop.xlane.xlu0 %1789
  %v1791 = vsel %vm163, %v1781, 0.0
  %1792 = vadd.xlane.f32.xlu0 %v1791
  %v1793 = vpop.xlane.xlu0 %1792
  %v1794 = vrcp.pop 32.0
  %v1795 = vmul.f32 %v1784, %v1794
  %v1796 = vmul.f32 %v1787, %v1794
  %v1797 = vmul.f32 %v1790, %v1794
  %v1798 = vmul.f32 %v1793, %v1794
  %v1799 = vsub.f32 %v1778, %v1795
  %v1800 = vsub.f32 %v1779, %v1796
  %v1801 = vsub.f32 %v1780, %v1797
  %v1802 = vsub.f32 %v1781, %v1798
  %v1803 = vmul.f32 %v1799, %v1799
  %v1804 = vmul.f32 %v1800, %v1800
  %v1805 = vmul.f32 %v1801, %v1801
  %v1806 = vmul.f32 %v1802, %v1802
  %v1807 = vsel %vm163, %v1803, 0.0
  %1808 = vadd.xlane.f32.xlu0 %v1807
  %v1809 = vpop.xlane.xlu0 %1808
  %v1810 = vsel %vm163, %v1804, 0.0
  %1811 = vadd.xlane.f32.xlu0 %v1810
  %v1812 = vpop.xlane.xlu0 %1811
  %v1813 = vsel %vm163, %v1805, 0.0
  %1814 = vadd.xlane.f32.xlu0 %v1813
  %v1815 = vpop.xlane.xlu0 %1814
  %v1816 = vsel %vm163, %v1806, 0.0
  %1817 = vadd.xlane.f32.xlu0 %v1816
  %v1818 = vpop.xlane.xlu0 %1817
  %v1819 = vmul.f32 %v1809, %v1794
  %v1820 = vmul.f32 %v1812, %v1794
  %v1821 = vmul.f32 %v1815, %v1794
  %v1822 = vmul.f32 %v1818, %v1794
  %v1823 = vadd.f32 %v1819, 1e-05
  %v1824 = vadd.f32 %v1820, 1e-05
  %v1825 = vadd.f32 %v1821, 1e-05
  %v1826 = vadd.f32 %v1822, 1e-05
  %v1827 = vrsqrt.pop %v1823
  %v1828 = vrsqrt.pop %v1824
  %v1829 = vrsqrt.pop %v1825
  %v1830 = vrsqrt.pop %v1826
  %v1831 = vmul.f32 %v1799, %v1827
  %v1832 = vmul.f32 %v1800, %v1828
  %v1833 = vmul.f32 %v1801, %v1829
  %v1834 = vmul.f32 %v1802, %v1830
  %v1835 = vlaneseq
  %v1836 = vshrl.u32 %v1835, 7
  %v1837 = vsub.s32 2, %v1836
  %v1838 = vrot.slane %v41, %v1837
  %v1839 = vmul.f32 %v1831, %v1838
  %v1840 = vmul.f32 %v1832, %v1838
  %v1841 = vmul.f32 %v1833, %v1838
  %v1842 = vmul.f32 %v1834, %v1838
  %v1843 = vlaneseq
  %v1844 = vshrl.u32 %v1843, 7
  %v1845 = vsub.s32 3, %v1844
  %v1846 = vrot.slane %v41, %v1845
  %v1847 = vadd.f32 %v1839, %v1846
  %v1848 = vadd.f32 %v1840, %v1846
  %v1849 = vadd.f32 %v1841, %v1846
  %v1850 = vadd.f32 %v1842, %v1846
  %v1851 = vld [vmem:[%s6] sm:$0xff]
  %v1852 = vld [vmem:[%s6 + $0x8] sm:$0xff]
  %v1853 = vld [vmem:[%s6 + $0x10] sm:$0xff]
  %v1854 = vld [vmem:[%s6 + $0x18] sm:$0xff]
  %v1855 = vlaneseq
  %v1856 = vshrl.u32 %v1855, 7
  %v1857 = vsub.s32 4, %v1856
  %v1858 = vrot.slane %v41, %v1857
  %v1860 = vsel %vm163, %v1847, 0
  %v1863 = vsel %vm163, %v1848, 0
  %v1866 = vsel %vm163, %v1849, 0
  %v1869 = vsel %vm163, %v1850, 0
  %1871 = vmatprep.subr.mxu0 0.0
  %1872 = vmatpush1.msra.mxu0 %v1851
  %1873 = vmatprep.subr.mxu0 0.0
  %1874 = vmatpush1.msra.mxu0 %v1852
  %1875 = vmatprep.subr.mxu0 0.0
  %1876 = vmatpush1.msra.mxu0 %v1853
  %1877 = vmatprep.subr.mxu0 0.0
  %1878 = vmatpush1.msra.mxu0 %v1854
  %1879 = vmatprep.subr.mxu0 0.0
  %1880 = vmatpush1.msra.mxu0 0.0
  %1881 = vmatprep.subr.mxu0 0.0
  %1882 = vmatpush1.msra.mxu0 0.0
  %1883 = vmatprep.subr.mxu0 0.0
  %1884 = vmatpush1.msra.mxu0 0.0
  %1885 = vmatprep.subr.mxu0 0.0
  %1886 = vmatpush1.msra.mxu0 0.0
  %1887 = vmatprep.subr.mxu0 0.0
  %1888 = vmatpush1.msra.mxu0 0.0
  %1889 = vmatprep.subr.mxu0 0.0
  %1890 = vmatpush1.msra.mxu0 0.0
  %1891 = vmatprep.subr.mxu0 0.0
  %1892 = vmatpush1.msra.mxu0 0.0
  %1893 = vmatprep.subr.mxu0 0.0
  %1894 = vmatpush1.msra.mxu0 0.0
  %1895 = vmatprep.subr.mxu0 0.0
  %1896 = vmatpush1.msra.mxu0 0.0
  %1897 = vmatprep.subr.mxu0 0.0
  %1898 = vmatpush1.msra.mxu0 0.0
  %1899 = vmatprep.subr.mxu0 0.0
  %1900 = vmatpush1.msra.mxu0 0.0
  %1901 = vmatprep.subr.mxu0 0.0
  %1902 = vmatpush1.msra.mxu0 0.0
  %1903 = vmatprep.subr.mxu0 0.0
  %1904 = vmatpush1.msra.mxu0 0.0
  %1905 = vmatprep.subr.mxu0 0.0
  %1906 = vmatpush1.msra.mxu0 0.0
  %1907 = vmatprep.subr.mxu0 0.0
  %1908 = vmatpush1.msra.mxu0 0.0
  %1909 = vmatprep.subr.mxu0 0.0
  %1910 = vmatpush1.msra.mxu0 0.0
  %1911 = vmatprep.subr.mxu0 0.0
  %1912 = vmatpush1.msra.mxu0 0.0
  %1913 = vmatprep.subr.mxu0 0.0
  %1914 = vmatpush1.msra.mxu0 0.0
  %1915 = vmatprep.subr.mxu0 0.0
  %1916 = vmatpush1.msra.mxu0 0.0
  %1917 = vmatprep.subr.mxu0 0.0
  %1918 = vmatpush1.msra.mxu0 0.0
  %1919 = vmatprep.subr.mxu0 0.0
  %1920 = vmatpush1.msra.mxu0 0.0
  %1921 = vmatprep.subr.mxu0 0.0
  %1922 = vmatpush1.msra.mxu0 0.0
  %1923 = vmatprep.subr.mxu0 0.0
  %1924 = vmatpush1.msra.mxu0 0.0
  %1925 = vmatprep.subr.mxu0 0.0
  %1926 = vmatpush1.msra.mxu0 0.0
  %1927 = vmatprep.subr.mxu0 0.0
  %1928 = vmatpush1.msra.mxu0 0.0
  %1929 = vmatprep.subr.mxu0 0.0
  %1930 = vmatpush1.msra.mxu0 0.0
  %1931 = vmatprep.subr.mxu0 0.0
  %1932 = vmatpush1.msra.mxu0 0.0
  %1933 = vmatprep.subr.mxu0 0.0
  %1934 = vmatpush1.msra.mxu0 0.0
  %1935 = vmatprep.mubr.f32.mxu0 0.0
  %1936 = vmatmul.mubr.f32.gmra.mrb[0].mxu0 %v1860
  %v1937 = vpop.f32.mrb[0].mxu0
  %v1938 = vadd.f32 %v1858, %v1937
  %v1939 = vpop.f32.mrb[0].mxu0
  %1940 = vmatprep.mubr.f32.mxu0 0.0
  %1941 = vmatmul.mubr.f32.gmra.mrb[0].mxu0 %v1863
  %v1942 = vpop.f32.mrb[0].mxu0
  %v1943 = vadd.f32 %v1858, %v1942
  %v1944 = vpop.f32.mrb[0].mxu0
  %1945 = vmatprep.mubr.f32.mxu0 0.0
  %1946 = vmatmul.mubr.f32.gmra.mrb[0].mxu0 %v1866
  %v1947 = vpop.f32.mrb[0].mxu0
  %v1948 = vadd.f32 %v1858, %v1947
  %v1949 = vpop.f32.mrb[0].mxu0
  %1950 = vmatprep.mubr.f32.mxu0 0.0
  %1951 = vmatmul.mubr.f32.gmra.mrb[0].mxu0 %v1869
  %v1952 = vpop.f32.mrb[0].mxu0
  %v1953 = vadd.f32 %v1858, %v1952
  %v1954 = vpop.f32.mrb[0].mxu0
  %1955 = vdwg.mxu0
  %v1956 = vmax.f32 %v1938, 0.0
  %v1957 = vmax.f32 %v1943, 0.0
  %v1958 = vmax.f32 %v1948, 0.0
  %v1959 = vmax.f32 %v1953, 0.0
  %v1960 = vld [vmem:[%s7] sm:$0xff]
  %v1961 = vld [vmem:[%s7 + $0x8] sm:$0xff]
  %v1962 = vld [vmem:[%s7 + $0x10] sm:$0xff]
  %v1963 = vld [vmem:[%s7 + $0x18] sm:$0xff]
  %v1964 = vld [vmem:[%s7 + $0x20] sm:$0xff]
  %v1965 = vld [vmem:[%s7 + $0x28] sm:$0xff]
  %v1966 = vld [vmem:[%s7 + $0x30] sm:$0xff]
  %v1967 = vld [vmem:[%s7 + $0x38] sm:$0xff]
  %v1968 = vlaneseq
  %v1969 = vshrl.u32 %v1968, 7
  %v1970 = vsub.s32 5, %v1969
  %v1971 = vrot.slane %v41, %v1970
  %vm1972 = vcmask 523264
  %v1974 = vsel %vm1972, %v1956, 0
  %v1977 = vsel %vm1972, %v1957, 0
  %v1980 = vsel %vm1972, %v1958, 0
  %v1983 = vsel %vm1972, %v1959, 0
  %1985 = vmatprep.subr.mxu0 0.0
  %1986 = vmatpush1.msra.mxu0 %v1960
  %1987 = vmatprep.subr.mxu0 0.0
  %1988 = vmatpush1.msra.mxu0 %v1961
  %1989 = vmatprep.subr.mxu0 0.0
  %1990 = vmatpush1.msra.mxu0 %v1962
  %1991 = vmatprep.subr.mxu0 0.0
  %1992 = vmatpush1.msra.mxu0 %v1963
  %1993 = vmatprep.subr.mxu0 0.0
  %1994 = vmatpush1.msra.mxu0 %v1964
  %1995 = vmatprep.subr.mxu0 0.0
  %1996 = vmatpush1.msra.mxu0 %v1965
  %1997 = vmatprep.subr.mxu0 0.0
  %1998 = vmatpush1.msra.mxu0 %v1966
  %1999 = vmatprep.subr.mxu0 0.0
  %2000 = vmatpush1.msra.mxu0 %v1967
  %2001 = vmatprep.subr.mxu0 0.0
  %2002 = vmatpush1.msra.mxu0 0.0
  %2003 = vmatprep.subr.mxu0 0.0
  %2004 = vmatpush1.msra.mxu0 0.0
  %2005 = vmatprep.subr.mxu0 0.0
  %2006 = vmatpush1.msra.mxu0 0.0
  %2007 = vmatprep.subr.mxu0 0.0
  %2008 = vmatpush1.msra.mxu0 0.0
  %2009 = vmatprep.subr.mxu0 0.0
  %2010 = vmatpush1.msra.mxu0 0.0
  %2011 = vmatprep.subr.mxu0 0.0
  %2012 = vmatpush1.msra.mxu0 0.0
  %2013 = vmatprep.subr.mxu0 0.0
  %2014 = vmatpush1.msra.mxu0 0.0
  %2015 = vmatprep.subr.mxu0 0.0
  %2016 = vmatpush1.msra.mxu0 0.0
  %2017 = vmatprep.subr.mxu0 0.0
  %2018 = vmatpush1.msra.mxu0 0.0
  %2019 = vmatprep.subr.mxu0 0.0
  %2020 = vmatpush1.msra.mxu0 0.0
  %2021 = vmatprep.subr.mxu0 0.0
  %2022 = vmatpush1.msra.mxu0 0.0
  %2023 = vmatprep.subr.mxu0 0.0
  %2024 = vmatpush1.msra.mxu0 0.0
  %2025 = vmatprep.subr.mxu0 0.0
  %2026 = vmatpush1.msra.mxu0 0.0
  %2027 = vmatprep.subr.mxu0 0.0
  %2028 = vmatpush1.msra.mxu0 0.0
  %2029 = vmatprep.subr.mxu0 0.0
  %2030 = vmatpush1.msra.mxu0 0.0
  %2031 = vmatprep.subr.mxu0 0.0
  %2032 = vmatpush1.msra.mxu0 0.0
  %2033 = vmatprep.subr.mxu0 0.0
  %2034 = vmatpush1.msra.mxu0 0.0
  %2035 = vmatprep.subr.mxu0 0.0
  %2036 = vmatpush1.msra.mxu0 0.0
  %2037 = vmatprep.subr.mxu0 0.0
  %2038 = vmatpush1.msra.mxu0 0.0
  %2039 = vmatprep.subr.mxu0 0.0
  %2040 = vmatpush1.msra.mxu0 0.0
  %2041 = vmatprep.subr.mxu0 0.0
  %2042 = vmatpush1.msra.mxu0 0.0
  %2043 = vmatprep.subr.mxu0 0.0
  %2044 = vmatpush1.msra.mxu0 0.0
  %2045 = vmatprep.subr.mxu0 0.0
  %2046 = vmatpush1.msra.mxu0 0.0
  %2047 = vmatprep.subr.mxu0 0.0
  %2048 = vmatpush1.msra.mxu0 0.0
  %2049 = vmatprep.mubr.f32.mxu0 0.0
  %2050 = vmatmul.mubr.f32.gmra.mrb[0].mxu0 %v1974
  %v2051 = vpop.f32.mrb[0].mxu0
  %v2052 = vadd.f32 %v1971, %v2051
  %v2053 = vpop.f32.mrb[0].mxu0
  %2054 = vmatprep.mubr.f32.mxu0 0.0
  %2055 = vmatmul.mubr.f32.gmra.mrb[0].mxu0 %v1977
  %v2056 = vpop.f32.mrb[0].mxu0
  %v2057 = vadd.f32 %v1971, %v2056
  %v2058 = vpop.f32.mrb[0].mxu0
  %2059 = vmatprep.mubr.f32.mxu0 0.0
  %2060 = vmatmul.mubr.f32.gmra.mrb[0].mxu0 %v1980
  %v2061 = vpop.f32.mrb[0].mxu0
  %v2062 = vadd.f32 %v1971, %v2061
  %v2063 = vpop.f32.mrb[0].mxu0
  %2064 = vmatprep.mubr.f32.mxu0 0.0
  %2065 = vmatmul.mubr.f32.gmra.mrb[0].mxu0 %v1983
  %v2066 = vpop.f32.mrb[0].mxu0
  %v2067 = vadd.f32 %v1971, %v2066
  %v2068 = vpop.f32.mrb[0].mxu0
  %2069 = vdwg.mxu0
  %v2070 = vadd.f32 %v1847, %v2052
  %v2071 = vadd.f32 %v1848, %v2057
  %v2072 = vadd.f32 %v1849, %v2062
  %v2073 = vadd.f32 %v1850, %v2067
  %v2074 = vsel %vm163, %v2070, 0.0
  %2075 = vadd.xlane.f32.xlu0 %v2074
  %v2076 = vpop.xlane.xlu0 %2075
  %v2077 = vsel %vm163, %v2071, 0.0
  %2078 = vadd.xlane.f32.xlu0 %v2077
  %v2079 = vpop.xlane.xlu0 %2078
  %v2080 = vsel %vm163, %v2072, 0.0
  %2081 = vadd.xlane.f32.xlu0 %v2080
  %v2082 = vpop.xlane.xlu0 %2081
  %v2083 = vsel %vm163, %v2073, 0.0
  %2084 = vadd.xlane.f32.xlu0 %v2083
  %v2085 = vpop.xlane.xlu0 %2084
  %v2086 = vmul.f32 %v2076, %v1794
  %v2087 = vmul.f32 %v2079, %v1794
  %v2088 = vmul.f32 %v2082, %v1794
  %v2089 = vmul.f32 %v2085, %v1794
  %v2090 = vsub.f32 %v2070, %v2086
  %v2091 = vsub.f32 %v2071, %v2087
  %v2092 = vsub.f32 %v2072, %v2088
  %v2093 = vsub.f32 %v2073, %v2089
  %v2094 = vmul.f32 %v2090, %v2090
  %v2095 = vmul.f32 %v2091, %v2091
  %v2096 = vmul.f32 %v2092, %v2092
  %v2097 = vmul.f32 %v2093, %v2093
  %v2098 = vsel %vm163, %v2094, 0.0
  %2099 = vadd.xlane.f32.xlu0 %v2098
  %v2100 = vpop.xlane.xlu0 %2099
  %v2101 = vsel %vm163, %v2095, 0.0
  %2102 = vadd.xlane.f32.xlu0 %v2101
  %v2103 = vpop.xlane.xlu0 %2102
  %v2104 = vsel %vm163, %v2096, 0.0
  %2105 = vadd.xlane.f32.xlu0 %v2104
  %v2106 = vpop.xlane.xlu0 %2105
  %v2107 = vsel %vm163, %v2097, 0.0
  %2108 = vadd.xlane.f32.xlu0 %v2107
  %v2109 = vpop.xlane.xlu0 %2108
  %v2110 = vmul.f32 %v2100, %v1794
  %v2111 = vmul.f32 %v2103, %v1794
  %v2112 = vmul.f32 %v2106, %v1794
  %v2113 = vmul.f32 %v2109, %v1794
  %v2114 = vadd.f32 %v2110, 1e-05
  %v2115 = vadd.f32 %v2111, 1e-05
  %v2116 = vadd.f32 %v2112, 1e-05
  %v2117 = vadd.f32 %v2113, 1e-05
  %v2118 = vrsqrt.pop %v2114
  %v2119 = vrsqrt.pop %v2115
  %v2120 = vrsqrt.pop %v2116
  %v2121 = vrsqrt.pop %v2117
  %v2122 = vmul.f32 %v2090, %v2118
  %v2123 = vmul.f32 %v2091, %v2119
  %v2124 = vmul.f32 %v2092, %v2120
  %v2125 = vmul.f32 %v2093, %v2121
  %v2126 = vlaneseq
  %v2127 = vshrl.u32 %v2126, 7
  %v2128 = vsub.s32 6, %v2127
  %v2129 = vrot.slane %v41, %v2128
  %v2130 = vmul.f32 %v2122, %v2129
  %v2131 = vmul.f32 %v2123, %v2129
  %v2132 = vmul.f32 %v2124, %v2129
  %v2133 = vmul.f32 %v2125, %v2129
  %v2134 = vlaneseq
  %v2135 = vshrl.u32 %v2134, 7
  %v2136 = vsub.s32 7, %v2135
  %v2137 = vrot.slane %v41, %v2136
  %v2138 = vadd.f32 %v2130, %v2137
  %v2139 = vadd.f32 %v2131, %v2137
  %v2140 = vadd.f32 %v2132, %v2137
  %v2141 = vadd.f32 %v2133, %v2137
  %v2142 = vld [vmem:[%s8] sm:$0xff]
  %v2143 = vld [vmem:[%s8 + $0x8] sm:$0xff]
  %v2144 = vld [vmem:[%s8 + $0x10] sm:$0xff]
  %v2145 = vld [vmem:[%s8 + $0x18] sm:$0xff]
  %v2146 = vld [vmem:[%s8 + $0x20] sm:$0xff]
  %v2147 = vld [vmem:[%s8 + $0x28] sm:$0xff]
  %v2148 = vld [vmem:[%s8 + $0x30] sm:$0xff]
  %v2149 = vld [vmem:[%s8 + $0x38] sm:$0xff]
  %v2151 = vsel %vm163, %v2140, 0
  %v2154 = vsel %vm163, %v2141, 0
  %2156 = vmatprep.subr.mxu0 0.0
  %2157 = vmatpush1.msra.mxu0 %v2146
  %2158 = vmatprep.subr.mxu0 0.0
  %2159 = vmatpush1.msra.mxu0 %v2147
  %2160 = vmatprep.subr.mxu0 0.0
  %2161 = vmatpush1.msra.mxu0 %v2148
  %2162 = vmatprep.subr.mxu0 0.0
  %2163 = vmatpush1.msra.mxu0 %v2149
  %2164 = vmatprep.subr.mxu0 0.0
  %2165 = vmatpush1.msra.mxu0 0.0
  %2166 = vmatprep.subr.mxu0 0.0
  %2167 = vmatpush1.msra.mxu0 0.0
  %2168 = vmatprep.subr.mxu0 0.0
  %2169 = vmatpush1.msra.mxu0 0.0
  %2170 = vmatprep.subr.mxu0 0.0
  %2171 = vmatpush1.msra.mxu0 0.0
  %2172 = vmatprep.subr.mxu0 0.0
  %2173 = vmatpush1.msra.mxu0 0.0
  %2174 = vmatprep.subr.mxu0 0.0
  %2175 = vmatpush1.msra.mxu0 0.0
  %2176 = vmatprep.subr.mxu0 0.0
  %2177 = vmatpush1.msra.mxu0 0.0
  %2178 = vmatprep.subr.mxu0 0.0
  %2179 = vmatpush1.msra.mxu0 0.0
  %2180 = vmatprep.subr.mxu0 0.0
  %2181 = vmatpush1.msra.mxu0 0.0
  %2182 = vmatprep.subr.mxu0 0.0
  %2183 = vmatpush1.msra.mxu0 0.0
  %2184 = vmatprep.subr.mxu0 0.0
  %2185 = vmatpush1.msra.mxu0 0.0
  %2186 = vmatprep.subr.mxu0 0.0
  %2187 = vmatpush1.msra.mxu0 0.0
  %2188 = vmatprep.subr.mxu0 0.0
  %2189 = vmatpush1.msra.mxu0 0.0
  %2190 = vmatprep.subr.mxu0 0.0
  %2191 = vmatpush1.msra.mxu0 0.0
  %2192 = vmatprep.subr.mxu0 0.0
  %2193 = vmatpush1.msra.mxu0 0.0
  %2194 = vmatprep.subr.mxu0 0.0
  %2195 = vmatpush1.msra.mxu0 0.0
  %2196 = vmatprep.subr.mxu0 0.0
  %2197 = vmatpush1.msra.mxu0 0.0
  %2198 = vmatprep.subr.mxu0 0.0
  %2199 = vmatpush1.msra.mxu0 0.0
  %2200 = vmatprep.subr.mxu0 0.0
  %2201 = vmatpush1.msra.mxu0 0.0
  %2202 = vmatprep.subr.mxu0 0.0
  %2203 = vmatpush1.msra.mxu0 0.0
  %2204 = vmatprep.subr.mxu0 0.0
  %2205 = vmatpush1.msra.mxu0 0.0
  %2206 = vmatprep.subr.mxu0 0.0
  %2207 = vmatpush1.msra.mxu0 0.0
  %2208 = vmatprep.subr.mxu0 0.0
  %2209 = vmatpush1.msra.mxu0 0.0
  %2210 = vmatprep.subr.mxu0 0.0
  %2211 = vmatpush1.msra.mxu0 0.0
  %2212 = vmatprep.subr.mxu0 0.0
  %2213 = vmatpush1.msra.mxu0 0.0
  %2214 = vmatprep.subr.mxu0 0.0
  %2215 = vmatpush1.msra.mxu0 0.0
  %2216 = vmatprep.subr.mxu0 0.0
  %2217 = vmatpush1.msra.mxu0 0.0
  %2218 = vmatprep.subr.mxu0 0.0
  %2219 = vmatpush1.msra.mxu0 0.0
  %2220 = vmatprep.mubr.f32.mxu0 0.0
  %2221 = vmatmul.mubr.f32.gmra.mrb[0].mxu0 %v2151
  %v2222 = vpop.f32.mrb[0].mxu0
  %v2223 = vadd.f32 0.0, %v2222
  %v2224 = vpop.f32.mrb[0].mxu0
  %2225 = vmatprep.mubr.f32.mxu0 0.0
  %2226 = vmatmul.mubr.f32.gmra.mrb[0].mxu0 %v2154
  %v2227 = vpop.f32.mrb[0].mxu0
  %v2228 = vadd.f32 0.0, %v2227
  %v2229 = vpop.f32.mrb[0].mxu0
  %2230 = vdwg.mxu0
  %v2232 = vsel %vm163, %v2138, 0
  %v2235 = vsel %vm163, %v2139, 0
  %2237 = vmatprep.subr.mxu0 0.0
  %2238 = vmatpush1.msra.mxu0 %v2142
  %2239 = vmatprep.subr.mxu0 0.0
  %2240 = vmatpush1.msra.mxu0 %v2143
  %2241 = vmatprep.subr.mxu0 0.0
  %2242 = vmatpush1.msra.mxu0 %v2144
  %2243 = vmatprep.subr.mxu0 0.0
  %2244 = vmatpush1.msra.mxu0 %v2145
  %2245 = vmatprep.subr.mxu0 0.0
  %2246 = vmatpush1.msra.mxu0 0.0
  %2247 = vmatprep.subr.mxu0 0.0
  %2248 = vmatpush1.msra.mxu0 0.0
  %2249 = vmatprep.subr.mxu0 0.0
  %2250 = vmatpush1.msra.mxu0 0.0
  %2251 = vmatprep.subr.mxu0 0.0
  %2252 = vmatpush1.msra.mxu0 0.0
  %2253 = vmatprep.subr.mxu0 0.0
  %2254 = vmatpush1.msra.mxu0 0.0
  %2255 = vmatprep.subr.mxu0 0.0
  %2256 = vmatpush1.msra.mxu0 0.0
  %2257 = vmatprep.subr.mxu0 0.0
  %2258 = vmatpush1.msra.mxu0 0.0
  %2259 = vmatprep.subr.mxu0 0.0
  %2260 = vmatpush1.msra.mxu0 0.0
  %2261 = vmatprep.subr.mxu0 0.0
  %2262 = vmatpush1.msra.mxu0 0.0
  %2263 = vmatprep.subr.mxu0 0.0
  %2264 = vmatpush1.msra.mxu0 0.0
  %2265 = vmatprep.subr.mxu0 0.0
  %2266 = vmatpush1.msra.mxu0 0.0
  %2267 = vmatprep.subr.mxu0 0.0
  %2268 = vmatpush1.msra.mxu0 0.0
  %2269 = vmatprep.subr.mxu0 0.0
  %2270 = vmatpush1.msra.mxu0 0.0
  %2271 = vmatprep.subr.mxu0 0.0
  %2272 = vmatpush1.msra.mxu0 0.0
  %2273 = vmatprep.subr.mxu0 0.0
  %2274 = vmatpush1.msra.mxu0 0.0
  %2275 = vmatprep.subr.mxu0 0.0
  %2276 = vmatpush1.msra.mxu0 0.0
  %2277 = vmatprep.subr.mxu0 0.0
  %2278 = vmatpush1.msra.mxu0 0.0
  %2279 = vmatprep.subr.mxu0 0.0
  %2280 = vmatpush1.msra.mxu0 0.0
  %2281 = vmatprep.subr.mxu0 0.0
  %2282 = vmatpush1.msra.mxu0 0.0
  %2283 = vmatprep.subr.mxu0 0.0
  %2284 = vmatpush1.msra.mxu0 0.0
  %2285 = vmatprep.subr.mxu0 0.0
  %2286 = vmatpush1.msra.mxu0 0.0
  %2287 = vmatprep.subr.mxu0 0.0
  %2288 = vmatpush1.msra.mxu0 0.0
  %2289 = vmatprep.subr.mxu0 0.0
  %2290 = vmatpush1.msra.mxu0 0.0
  %2291 = vmatprep.subr.mxu0 0.0
  %2292 = vmatpush1.msra.mxu0 0.0
  %2293 = vmatprep.subr.mxu0 0.0
  %2294 = vmatpush1.msra.mxu0 0.0
  %2295 = vmatprep.subr.mxu0 0.0
  %2296 = vmatpush1.msra.mxu0 0.0
  %2297 = vmatprep.subr.mxu0 0.0
  %2298 = vmatpush1.msra.mxu0 0.0
  %2299 = vmatprep.subr.mxu0 0.0
  %2300 = vmatpush1.msra.mxu0 0.0
  %2301 = vmatprep.mubr.f32.mxu0 0.0
  %2302 = vmatmul.mubr.f32.gmra.mrb[0].mxu0 %v2232
  %v2303 = vpop.f32.mrb[0].mxu0
  %v2304 = vadd.f32 %v2223, %v2303
  %v2305 = vpop.f32.mrb[0].mxu0
  %2306 = vmatprep.mubr.f32.mxu0 0.0
  %2307 = vmatmul.mubr.f32.gmra.mrb[0].mxu0 %v2235
  %v2308 = vpop.f32.mrb[0].mxu0
  %v2309 = vadd.f32 %v2228, %v2308
  %v2310 = vpop.f32.mrb[0].mxu0
  %2311 = vdwg.mxu0
  %v2312 = vlaneseq
  %v2313 = vshrl.u32 %v2312, 7
  %v2314 = vsub.s32 0, %v2313
  %v2315 = vrot.slane %v42, %v2314
  %v2316 = vadd.f32 %v2304, %v2315
  %v2317 = vadd.f32 %v2309, %v2315
  %vm2318 = vcmp.ge.f32.partialorder %v2316, 0.0
  %vm2319 = vcmp.ge.f32.partialorder %v2317, 0.0
  %v2320 = vmul.f32 %v2316, 0.01
  %v2321 = vmul.f32 %v2317, 0.01
  %v2322 = vsel %vm2318, %v2316, %v2320
  %v2323 = vsel %vm2319, %v2317, %v2321
  %v2324 = vld [vmem:[%s9] sm:$0xff]
  %v2325 = vld [vmem:[%s9 + $0x8] sm:$0xff]
  %v2326 = vld [vmem:[%s9 + $0x10] sm:$0xff]
  %v2327 = vld [vmem:[%s9 + $0x18] sm:$0xff]
  %v2328 = vlaneseq
  %v2329 = vshrl.u32 %v2328, 7
  %v2330 = vsub.s32 1, %v2329
  %v2331 = vrot.slane %v42, %v2330
  %v2333 = vsel %vm163, %v2322, 0
  %v2336 = vsel %vm163, %v2323, 0
  %2338 = vmatprep.subr.mxu0 0.0
  %2339 = vmatpush1.msra.mxu0 %v2324
  %2340 = vmatprep.subr.mxu0 0.0
  %2341 = vmatpush1.msra.mxu0 %v2325
  %2342 = vmatprep.subr.mxu0 0.0
  %2343 = vmatpush1.msra.mxu0 %v2326
  %2344 = vmatprep.subr.mxu0 0.0
  %2345 = vmatpush1.msra.mxu0 %v2327
  %2346 = vmatprep.subr.mxu0 0.0
  %2347 = vmatpush1.msra.mxu0 0.0
  %2348 = vmatprep.subr.mxu0 0.0
  %2349 = vmatpush1.msra.mxu0 0.0
  %2350 = vmatprep.subr.mxu0 0.0
  %2351 = vmatpush1.msra.mxu0 0.0
  %2352 = vmatprep.subr.mxu0 0.0
  %2353 = vmatpush1.msra.mxu0 0.0
  %2354 = vmatprep.subr.mxu0 0.0
  %2355 = vmatpush1.msra.mxu0 0.0
  %2356 = vmatprep.subr.mxu0 0.0
  %2357 = vmatpush1.msra.mxu0 0.0
  %2358 = vmatprep.subr.mxu0 0.0
  %2359 = vmatpush1.msra.mxu0 0.0
  %2360 = vmatprep.subr.mxu0 0.0
  %2361 = vmatpush1.msra.mxu0 0.0
  %2362 = vmatprep.subr.mxu0 0.0
  %2363 = vmatpush1.msra.mxu0 0.0
  %2364 = vmatprep.subr.mxu0 0.0
  %2365 = vmatpush1.msra.mxu0 0.0
  %2366 = vmatprep.subr.mxu0 0.0
  %2367 = vmatpush1.msra.mxu0 0.0
  %2368 = vmatprep.subr.mxu0 0.0
  %2369 = vmatpush1.msra.mxu0 0.0
  %2370 = vmatprep.subr.mxu0 0.0
  %2371 = vmatpush1.msra.mxu0 0.0
  %2372 = vmatprep.subr.mxu0 0.0
  %2373 = vmatpush1.msra.mxu0 0.0
  %2374 = vmatprep.subr.mxu0 0.0
  %2375 = vmatpush1.msra.mxu0 0.0
  %2376 = vmatprep.subr.mxu0 0.0
  %2377 = vmatpush1.msra.mxu0 0.0
  %2378 = vmatprep.subr.mxu0 0.0
  %2379 = vmatpush1.msra.mxu0 0.0
  %2380 = vmatprep.subr.mxu0 0.0
  %2381 = vmatpush1.msra.mxu0 0.0
  %2382 = vmatprep.subr.mxu0 0.0
  %2383 = vmatpush1.msra.mxu0 0.0
  %2384 = vmatprep.subr.mxu0 0.0
  %2385 = vmatpush1.msra.mxu0 0.0
  %2386 = vmatprep.subr.mxu0 0.0
  %2387 = vmatpush1.msra.mxu0 0.0
  %2388 = vmatprep.subr.mxu0 0.0
  %2389 = vmatpush1.msra.mxu0 0.0
  %2390 = vmatprep.subr.mxu0 0.0
  %2391 = vmatpush1.msra.mxu0 0.0
  %2392 = vmatprep.subr.mxu0 0.0
  %2393 = vmatpush1.msra.mxu0 0.0
  %2394 = vmatprep.subr.mxu0 0.0
  %2395 = vmatpush1.msra.mxu0 0.0
  %2396 = vmatprep.subr.mxu0 0.0
  %2397 = vmatpush1.msra.mxu0 0.0
  %2398 = vmatprep.subr.mxu0 0.0
  %2399 = vmatpush1.msra.mxu0 0.0
  %2400 = vmatprep.subr.mxu0 0.0
  %2401 = vmatpush1.msra.mxu0 0.0
  %2402 = vmatprep.mubr.f32.mxu0 0.0
  %2403 = vmatmul.mubr.f32.gmra.mrb[0].mxu0 %v2333
  %v2404 = vpop.f32.mrb[0].mxu0
  %v2405 = vadd.f32 %v2331, %v2404
  %v2406 = vpop.f32.mrb[0].mxu0
  %2407 = vmatprep.mubr.f32.mxu0 0.0
  %2408 = vmatmul.mubr.f32.gmra.mrb[0].mxu0 %v2336
  %v2409 = vpop.f32.mrb[0].mxu0
  %v2410 = vadd.f32 %v2331, %v2409
  %v2411 = vpop.f32.mrb[0].mxu0
  %2412 = vdwg.mxu0
  %vm2413 = vcmp.ge.f32.partialorder %v2405, 0.0
  %vm2414 = vcmp.ge.f32.partialorder %v2410, 0.0
  %v2415 = vmul.f32 %v2405, 0.01
  %v2416 = vmul.f32 %v2410, 0.01
  %v2417 = vsel %vm2413, %v2405, %v2415
  %v2418 = vsel %vm2414, %v2410, %v2416
  %v2419 = vld [vmem:[%s10] sm:$0x1]
  %v2421 = vrot.slane %v42, 2
  %v2424 = vsel %vm57, %v2419, 0
  %v2427 = vsel %vm57, %v2417, 0
  %v2430 = vsel %vm57, %v2418, 0
  %2432 = vmatprep.subr.mxu0 0.0
  %2433 = vmatpush1.xpose.msra.mxu0 %v2427
  %2434 = vmatprep.subr.mxu0 0.0
  %2435 = vmatpush1.xpose.msra.mxu0 %v2430
  %2436 = vmatprep.subr.mxu0 0.0
  %2437 = vmatpush1.xpose.msra.mxu0 0.0
  %2438 = vmatprep.subr.mxu0 0.0
  %2439 = vmatpush1.xpose.msra.mxu0 0.0
  %2440 = vmatprep.subr.mxu0 0.0
  %2441 = vmatpush1.xpose.msra.mxu0 0.0
  %2442 = vmatprep.subr.mxu0 0.0
  %2443 = vmatpush1.xpose.msra.mxu0 0.0
  %2444 = vmatprep.subr.mxu0 0.0
  %2445 = vmatpush1.xpose.msra.mxu0 0.0
  %2446 = vmatprep.subr.mxu0 0.0
  %2447 = vmatpush1.xpose.msra.mxu0 0.0
  %2448 = vmatprep.subr.mxu0 0.0
  %2449 = vmatpush1.xpose.msra.mxu0 0.0
  %2450 = vmatprep.subr.mxu0 0.0
  %2451 = vmatpush1.xpose.msra.mxu0 0.0
  %2452 = vmatprep.subr.mxu0 0.0
  %2453 = vmatpush1.xpose.msra.mxu0 0.0
  %2454 = vmatprep.subr.mxu0 0.0
  %2455 = vmatpush1.xpose.msra.mxu0 0.0
  %2456 = vmatprep.subr.mxu0 0.0
  %2457 = vmatpush1.xpose.msra.mxu0 0.0
  %2458 = vmatprep.subr.mxu0 0.0
  %2459 = vmatpush1.xpose.msra.mxu0 0.0
  %2460 = vmatprep.subr.mxu0 0.0
  %2461 = vmatpush1.xpose.msra.mxu0 0.0
  %2462 = vmatprep.subr.mxu0 0.0
  %2463 = vmatpush1.xpose.msra.mxu0 0.0
  %2464 = vmatprep.subr.mxu0 0.0
  %2465 = vmatpush1.xpose.msra.mxu0 0.0
  %2466 = vmatprep.subr.mxu0 0.0
  %2467 = vmatpush1.xpose.msra.mxu0 0.0
  %2468 = vmatprep.subr.mxu0 0.0
  %2469 = vmatpush1.xpose.msra.mxu0 0.0
  %2470 = vmatprep.subr.mxu0 0.0
  %2471 = vmatpush1.xpose.msra.mxu0 0.0
  %2472 = vmatprep.subr.mxu0 0.0
  %2473 = vmatpush1.xpose.msra.mxu0 0.0
  %2474 = vmatprep.subr.mxu0 0.0
  %2475 = vmatpush1.xpose.msra.mxu0 0.0
  %2476 = vmatprep.subr.mxu0 0.0
  %2477 = vmatpush1.xpose.msra.mxu0 0.0
  %2478 = vmatprep.subr.mxu0 0.0
  %2479 = vmatpush1.xpose.msra.mxu0 0.0
  %2480 = vmatprep.subr.mxu0 0.0
  %2481 = vmatpush1.xpose.msra.mxu0 0.0
  %2482 = vmatprep.subr.mxu0 0.0
  %2483 = vmatpush1.xpose.msra.mxu0 0.0
  %2484 = vmatprep.subr.mxu0 0.0
  %2485 = vmatpush1.xpose.msra.mxu0 0.0
  %2486 = vmatprep.subr.mxu0 0.0
  %2487 = vmatpush1.xpose.msra.mxu0 0.0
  %2488 = vmatprep.subr.mxu0 0.0
  %2489 = vmatpush1.xpose.msra.mxu0 0.0
  %2490 = vmatprep.subr.mxu0 0.0
  %2491 = vmatpush1.xpose.msra.mxu0 0.0
  %2492 = vmatprep.subr.mxu0 0.0
  %2493 = vmatpush1.xpose.msra.mxu0 0.0
  %2494 = vmatprep.subr.mxu0 0.0
  %2495 = vmatpush1.xpose.msra.mxu0 0.0
  %2496 = vmatprep.mubr.f32.mxu0 0.0
  %2497 = vmatmul.mubr.f32.gmra.mrb[0].mxu0 %v2424
  %v2498 = vpop.f32.mrb[0].mxu0
  %v2499 = vadd.f32 %v2421, %v2498
  %v2500 = vpop.f32.mrb[0].mxu0
  %2501 = vdwg.mxu0
  %v2502 = vand.u32 2147483647, %v2499
  %v2503 = vsub.f32 0.0, %v2502
  %v2504 = vmul.f32 %v2503, 1.442695
  %v2505 = vpow.pop %v2504
  %vm2506 = vcmp.ge.f32.partialorder %v2499, 0.0
  %v2507 = vadd.f32 %v2505, 1.0
  %v2508 = vrcp.pop %v2507
  %v2509 = vmul.f32 1.0, %v2508
  %v2510 = vmul.f32 %v2505, %v2508
  %v2511 = vsel %vm2506, %v2509, %v2510
  %vm2512 = vcmask 122880
  %2513 = vst.msk [vmem:[%s12] sm:$0x1] %vm2512, %v2511
  // Predicated region
  $region50: #{transformer_discriminator.1} parent=0 // pred_check
    _
  $region51: #{transformer_discriminator.1} parent=0 // pred_check_branch
    %2515 = sbr.rel (0) target = $region53
  $region52: #{transformer_discriminator.1} parent=0 // pred_region
    _
  $region53: #{transformer_discriminator.1} parent=0 // pred_fallthru
    _
  // Predicated region
  $region54: #{transformer_discriminator.1} parent=0 // pred_check
    _
  $region55: #{transformer_discriminator.1} parent=0 // pred_check_branch
    %2517 = sbr.rel (0) target = $region57
  $region56: #{transformer_discriminator.1} parent=0 // pred_region
    _
  $region57: #{transformer_discriminator.1} parent=0 // pred_fallthru
    _

</llo_original>
